<compile_context>
chip_gen: v7x
topology: tpu7x:2x2x1
jax: 0.10.0
libtpu: 0.0.40
codegen_flags: <defaults>
</compile_context>

<pallas_src>
import functools

import jax
import jax.numpy as jnp
import numpy as np
from jax import lax
from jax.experimental import pallas as pl
from jax.experimental.pallas import tpu as pltpu

_LANES = 128  # gate outputs are written lane-dense at this width


def _gcn_fused_eye(x, adj_off, n_eye, w, b):
    """GraphConvolution.forward with `adj = adj_off + n_eye * I` folded in.

    adj_off is elementwise nonnegative at both call sites (sigmoid output /
    relu output), so rowsum(|adj_off + n_eye*I|) == rowsum(adj_off) + n_eye.
      support  = x @ w
      d        = rsqrt(rowsum(adj_off) + n_eye)
      out      = d * (adj_off @ (d*support) + n_eye * d*support) + b
    (the transpose dance in the torch code reduces to norm_adj @ support)
    """
    f32 = jnp.float32
    d = lax.rsqrt(jnp.sum(adj_off, axis=-1, keepdims=True) + n_eye)      # [n,1]
    support = jnp.dot(x, w, preferred_element_type=f32)
    ds = d * support
    return d * (jnp.dot(adj_off, ds, preferred_element_type=f32) + n_eye * ds) + b


def fused_kernel(alpha,
                 sa_ref, sat_ref, fa_ref, fat_ref, x_ref, sadj_ref,
                 wf_ref, bf_ref, ws_ref, bs_ref,
                 wc_ref, bc_ref, wls_ref, bls_ref,
                 adjm_ref, wg_ref, ag_ref,
                 o_ref, rf_ref, rs_ref):
    f32 = jnp.float32
    SA = sa_ref[...]       # [N, S]  raw struct_assign
    SAT = sat_ref[...]     # [S, N]  struct_assign^T (pre-transposed host-side)
    FA = fa_ref[...]       # [S, F]  raw fnc_assign
    FAT = fat_ref[...]     # [F, S]  fnc_assign^T
    X = x_ref[...]         # [N, H]  raw_feat
    SAdj = sadj_ref[...]   # [S, S]

    # ---- assignment normalization + pooling --------------------------------
    # column sums of SA/FA == row sums of the transposed copies, so every
    # matmul below contracts the last dim of its LHS (no in-kernel transposes).
    s_col = jax.nn.relu(jnp.sum(SAT, axis=-1, keepdims=True) - 1.0) + 1.0    # [S,1]
    struct_emb = jnp.dot(SAT, X, preferred_element_type=f32) / s_col         # [S,H]

    f_col = jax.nn.relu(jnp.sum(FAT, axis=-1, keepdims=True) - 1.0) + 1.0    # [F,1]
    fnc_emb = jnp.dot(FAT, struct_emb, preferred_element_type=f32) / f_col   # [F,H]

    # ---- fnc adjacency + fnc GCN (both +I's folded into degree/aggregation) -
    sig = jax.nn.sigmoid(
        lax.dot_general(fnc_emb, fnc_emb, (((1,), (1,)), ((), ())),
                        preferred_element_type=f32))                         # [F,F]
    fnc_emb2 = _gcn_fused_eye(fnc_emb, sig, 2.0, wf_ref[...], bf_ref[...])   # [F,H]

    # ---- fnc message + r_f gate (gate on VPU: multiply + lane reduce) -------
    fa_n = FA / (jax.nn.relu(jnp.sum(FA, axis=0, keepdims=True) - 1.0) + 1.0)
    denom = jax.nn.relu(jnp.sum(fa_n, axis=-1, keepdims=True) - 1.0) + 1.0   # [S,1]
    fnc_message = jnp.dot(FA, fnc_emb2, preferred_element_type=f32) / denom  # [S,H]

    Wc = wc_ref[...]        # [2,H]: row 0 -> struct_emb half, row 1 -> message half
    rf = jax.nn.sigmoid(
        jnp.sum(struct_emb * Wc[0:1, :], axis=-1, keepdims=True)
        + jnp.sum(fnc_message * Wc[1:2, :], axis=-1, keepdims=True)
        + bc_ref[...])                                                       # [S,1]
    rf_ref[...] = jnp.broadcast_to(rf, rf_ref.shape)                         # lane-dense store

    struct_emb2 = struct_emb + 0.15 * fnc_message

    # ---- struct adjacency surgery + struct GCN ------------------------------
    ns = SAdj.shape[0]
    rr = lax.broadcasted_iota(jnp.int32, (ns, ns), 0)
    cc = lax.broadcasted_iota(jnp.int32, (ns, ns), 1)
    a_off = jax.nn.relu(jnp.where(rr == cc, SAdj - 10000.0, SAdj))           # relu(SAdj - 1e4*I)
    struct_emb3 = _gcn_fused_eye(struct_emb2, a_off, 2.0,
                                 ws_ref[...], bs_ref[...])                   # [S,H]

    # ---- struct message + r_s gate + pre-GAT features (stay in VMEM) --------
    struct_message = jnp.dot(SA, struct_emb3, preferred_element_type=f32)    # [N,H]
    Wls = wls_ref[...]      # [2,H]
    rs = jax.nn.sigmoid(
        jnp.sum(X * Wls[0:1, :], axis=-1, keepdims=True)
        + jnp.sum(struct_message * Wls[1:2, :], axis=-1, keepdims=True)
        + bls_ref[...])                                                      # [N,1]
    rs_ref[...] = jnp.broadcast_to(rs, rs_ref.shape)                         # lane-dense store

    feat = X + 0.5 * struct_message                                          # pre_gat, never leaves VMEM

    # ---- SPGAT (dense 0/1 edge mask), fused in the same body ----------------
    mask = adjm_ref[...]                                                     # [N,N]
    h = jnp.dot(feat, wg_ref[...], preferred_element_type=f32)               # [N,H]
    a = ag_ref[...]                                                          # [2,H]: a[0]=src half, a[1]=dst half
    s_left = lax.dot_general(h, a[0:1, :], (((1,), (1,)), ((), ())),
                             preferred_element_type=f32)                     # [N,1]
    s_right = lax.dot_general(a[1:2, :], h, (((1,), (1,)), ((), ())),
                              preferred_element_type=f32)                    # [1,N]
    e = s_left + s_right                                                     # [N,N]
    e = jnp.where(e > 0, e, alpha * e)                                       # LeakyReLU

    has_edge = mask != 0.0
    # per-row max: softmax is shift-invariant per row, identical result modulo
    # the 1e-15 epsilon; shorter reduce chain than a global scalar max.
    m = jnp.max(jnp.where(has_edge, e, jnp.float32(-1e30)),
                axis=-1, keepdims=True)                                      # [N,1]
    ev = jnp.where(has_edge, jnp.exp(e - m), 0.0)
    e_rowsum = jnp.sum(ev, axis=-1, keepdims=True)                           # [N,1]
    # TODO(synk): nn.Dropout on edge values is treated as identity (eval mode).
    h_prime = jnp.dot(ev, h, preferred_element_type=f32) / (e_rowsum + 1e-15)
    o_ref[...] = jnp.where(h_prime > 0, h_prime, jnp.exp(h_prime) - 1.0)     # ELU (concat=True)


def graph_encoder_tl_core(params, struct_adj, raw_feat, raw_adj_mask):
    N, H = raw_feat.shape
    S = params["struct_assign"].shape[1]

    SA = params["struct_assign"]
    FA = params["fnc_assign"]
    # Host-side layout plumbing only: pre-transposed assignments and gate
    # weights reshaped to [2, H] rows (no compute hoisted out of the kernel).
    ins = (SA, SA.T, FA, FA.T, raw_feat, struct_adj,
           params["fnc_gcn_w"], params["fnc_gcn_b"],
           params["struct_gcn_w"], params["struct_gcn_b"],
           params["l_c_w"].reshape(2, H), params["l_c_b"].reshape(1, 1),
           params["l_s_w"].reshape(2, H), params["l_s_b"].reshape(1, 1),
           raw_adj_mask, params["gat_w"], params["gat_a"])

    out, rf_wide, rs_wide = pl.pallas_call(
        functools.partial(fused_kernel, params["alpha"]),
        out_shape=(jax.ShapeDtypeStruct((N, H), jnp.float32),
                   jax.ShapeDtypeStruct((S, _LANES), jnp.float32),
                   jax.ShapeDtypeStruct((N, _LANES), jnp.float32)),
        compiler_params=pltpu.CompilerParams(vmem_limit_bytes=32 * 1024 * 1024),
    )(*ins)

    return out, rf_wide[:, :1], rs_wide[:, :1]


def reference(params, struct_adj, raw_feat, raw_adj_mask):
    """Pure-JAX re-implementation of the torch forward (for validation)."""
    SA, FA, X = params["struct_assign"], params["fnc_assign"], raw_feat
    sa_n = SA / (jax.nn.relu(SA.sum(0) - 1.0) + 1.0)
    fa_n = FA / (jax.nn.relu(FA.sum(0) - 1.0) + 1.0)
    struct_emb = sa_n.T @ X
    fnc_emb = fa_n.T @ struct_emb
    nf = fnc_emb.shape[0]
    fnc_adj = jax.nn.sigmoid(fnc_emb @ fnc_emb.T) + jnp.eye(nf)

    def gcn(x, adj, w, b):
        n = adj.shape[0]
        ap = adj + jnp.eye(n)
        d = jnp.sum(jnp.abs(ap), -1) ** -0.5
        na = ap * d[:, None] * d[None, :]
        return na @ (x @ w) + b

    fnc_emb2 = gcn(fnc_emb, fnc_adj, params["fnc_gcn_w"], params["fnc_gcn_b"])
    fnc_msg = (FA @ fnc_emb2) / (jax.nn.relu(fa_n.sum(1) - 1.0) + 1.0)[:, None]
    r_f = jax.nn.sigmoid(jnp.concatenate([struct_emb, fnc_msg], 1) @ params["l_c_w"]
                         + params["l_c_b"])
    struct_emb2 = struct_emb + 0.15 * fnc_msg
    ns = struct_adj.shape[0]
    s_adj = jax.nn.relu(struct_adj - jnp.eye(ns) * 10000.0) + jnp.eye(ns)
    struct_emb3 = gcn(struct_emb2, s_adj, params["struct_gcn_w"], params["struct_gcn_b"])
    struct_msg = SA @ struct_emb3
    r_s = jax.nn.sigmoid(jnp.concatenate([X, struct_msg], 1) @ params["l_s_w"]
                         + params["l_s_b"])
    feat = X + 0.5 * struct_msg

    h = feat @ params["gat_w"]
    a = params["gat_a"]
    sl = (h * a[0]).sum(1, keepdims=True)
    sr = (h * a[1]).sum(1, keepdims=True)
    e = sl + sr.T
    e = jnp.where(e > 0, e, params["alpha"] * e)
    mask = raw_adj_mask != 0
    m = jnp.max(jnp.where(mask, e, -1e30))            # torch uses a global max
    ev = jnp.where(mask, jnp.exp(e - m), 0.0)
    hp = (ev @ h) / (ev.sum(1, keepdims=True) + 1e-15)
    out = jnp.where(hp > 0, hp, jnp.exp(hp) - 1.0)
    return out, r_f, r_s


if __name__ == "__main__":
    N, S, Fc, H = 64, 16, 8, 32     # nodes, struct clusters, fnc clusters, hidden_dims
    alpha = 0.2                     # LeakyReLU slope (hparams.alpha)

    key = jax.random.PRNGKey(0)
    ks = jax.random.split(key, 16)

    struct_assign = jax.random.uniform(ks[0], (N, S), jnp.float32)
    fnc_assign = jax.random.uniform(ks[1], (S, Fc), jnp.float32)
    raw_feat = jax.random.normal(ks[2], (N, H), jnp.float32)
    struct_adj = jax.random.uniform(ks[3], (S, S), jnp.float32)
    raw_adj_mask = (jax.random.uniform(ks[4], (N, N)) < 0.2).astype(jnp.float32)
    raw_adj_mask = jnp.maximum(raw_adj_mask, jnp.eye(N, dtype=jnp.float32))  # self-loops

    xav = 1.414 * (2.0 / (H + H)) ** 0.5
    params = dict(
        struct_assign=struct_assign,
        fnc_assign=fnc_assign,
        fnc_gcn_w=jax.random.uniform(ks[5], (H, H), jnp.float32, -0.5, 0.5),
        fnc_gcn_b=jax.random.uniform(ks[6], (1, H), jnp.float32, -0.5, 0.5),
        struct_gcn_w=jax.random.uniform(ks[7], (H, H), jnp.float32, -0.5, 0.5),
        struct_gcn_b=jax.random.uniform(ks[8], (1, H), jnp.float32, -0.5, 0.5),
        l_c_w=jax.random.uniform(ks[9], (2 * H, 1), jnp.float32, -0.3, 0.3),
        l_c_b=jax.random.uniform(ks[10], (1, 1), jnp.float32, -0.3, 0.3),
        l_s_w=jax.random.uniform(ks[11], (2 * H, 1), jnp.float32, -0.3, 0.3),
        l_s_b=jax.random.uniform(ks[12], (1, 1), jnp.float32, -0.3, 0.3),
        gat_w=jax.random.normal(ks[13], (H, H), jnp.float32) * xav,
        gat_a=jax.random.normal(ks[14], (2, H), jnp.float32)
              * (1.414 * (2.0 / (1 + 2 * H)) ** 0.5),
        alpha=alpha,
    )

    out, r_f, r_s = graph_encoder_tl_core(params, struct_adj, raw_feat, raw_adj_mask)
    jax.block_until_ready((out, r_f, r_s))

    ref_out, ref_rf, ref_rs = reference(params, struct_adj, raw_feat, raw_adj_mask)
    ok = (np.allclose(np.asarray(out), np.asarray(ref_out), rtol=1e-2, atol=1e-2)
          and np.allclose(np.asarray(r_f), np.asarray(ref_rf), rtol=1e-2, atol=1e-2)
          and np.allclose(np.asarray(r_s), np.asarray(ref_rs), rtol=1e-2, atol=1e-2))
    if not ok:
        raise AssertionError("Pallas output does not match JAX reference")
    assert out.shape == (N, H) and r_f.shape == (S, 1) and r_s.shape == (N, 1)

    print("KERNEL_OK")
</pallas_src>

<mosaic_0001>
module attributes {stable_mosaic.version = 11 : i64} {
  func.func @fused_kernel(%arg0: memref<64x16xf32, #tpu.memory_space<vmem>>, %arg1: memref<16x64xf32, #tpu.memory_space<vmem>>, %arg2: memref<16x8xf32, #tpu.memory_space<vmem>>, %arg3: memref<8x16xf32, #tpu.memory_space<vmem>>, %arg4: memref<64x32xf32, #tpu.memory_space<vmem>>, %arg5: memref<16x16xf32, #tpu.memory_space<vmem>>, %arg6: memref<32x32xf32, #tpu.memory_space<vmem>>, %arg7: memref<1x32xf32, #tpu.memory_space<vmem>>, %arg8: memref<32x32xf32, #tpu.memory_space<vmem>>, %arg9: memref<1x32xf32, #tpu.memory_space<vmem>>, %arg10: memref<2x32xf32, #tpu.memory_space<vmem>>, %arg11: memref<1x1xf32, #tpu.memory_space<vmem>>, %arg12: memref<2x32xf32, #tpu.memory_space<vmem>>, %arg13: memref<1x1xf32, #tpu.memory_space<vmem>>, %arg14: memref<64x64xf32, #tpu.memory_space<vmem>>, %arg15: memref<32x32xf32, #tpu.memory_space<vmem>>, %arg16: memref<2x32xf32, #tpu.memory_space<vmem>>, %arg17: memref<64x32xf32, #tpu.memory_space<vmem>>, %arg18: memref<16x128xf32, #tpu.memory_space<vmem>>, %arg19: memref<64x128xf32, #tpu.memory_space<vmem>>) attributes {dimension_semantics = [], scalar_prefetch = 0 : i64, scratch_operands = 0 : i64, tpu.core_type = #tpu.core_type<tc>} {
    %c0 = arith.constant 0 : index
    %c0_0 = arith.constant 0 : index
    %0 = vector.load %arg0[%c0, %c0_0] : memref<64x16xf32, #tpu.memory_space<vmem>>, vector<64x16xf32>
    %c0_1 = arith.constant 0 : index
    %c0_2 = arith.constant 0 : index
    %1 = vector.load %arg1[%c0_1, %c0_2] : memref<16x64xf32, #tpu.memory_space<vmem>>, vector<16x64xf32>
    %c0_3 = arith.constant 0 : index
    %c0_4 = arith.constant 0 : index
    %2 = vector.load %arg2[%c0_3, %c0_4] : memref<16x8xf32, #tpu.memory_space<vmem>>, vector<16x8xf32>
    %c0_5 = arith.constant 0 : index
    %c0_6 = arith.constant 0 : index
    %3 = vector.load %arg3[%c0_5, %c0_6] : memref<8x16xf32, #tpu.memory_space<vmem>>, vector<8x16xf32>
    %c0_7 = arith.constant 0 : index
    %c0_8 = arith.constant 0 : index
    %4 = vector.load %arg4[%c0_7, %c0_8] : memref<64x32xf32, #tpu.memory_space<vmem>>, vector<64x32xf32>
    %c0_9 = arith.constant 0 : index
    %c0_10 = arith.constant 0 : index
    %5 = vector.load %arg5[%c0_9, %c0_10] : memref<16x16xf32, #tpu.memory_space<vmem>>, vector<16x16xf32>
    %cst = arith.constant dense<0.000000e+00> : vector<16xf32>
    %6 = vector.multi_reduction <add>, %1, %cst [1] : vector<16x64xf32> to vector<16xf32>
    %7 = vector.shape_cast %6 : vector<16xf32> to vector<16x1xf32>
    %cst_11 = arith.constant 1.000000e+00 : f32
    %8 = vector.broadcast %cst_11 : f32 to vector<16x1xf32>
    %9 = arith.subf %7, %8 : vector<16x1xf32>
    %cst_12 = arith.constant 0.000000e+00 : f32
    %10 = vector.broadcast %cst_12 : f32 to vector<16x1xf32>
    %11 = arith.maximumf %9, %10 : vector<16x1xf32>
    %cst_13 = arith.constant 1.000000e+00 : f32
    %12 = vector.broadcast %cst_13 : f32 to vector<16x1xf32>
    %13 = arith.addf %11, %12 : vector<16x1xf32>
    %cst_14 = arith.constant dense<0.000000e+00> : vector<16x32xf32>
    %14 = tpu.matmul %1, %4, %cst_14 {dimension_numbers = #tpu.dot_dimension_numbers<[1], [0], [0], [1], [0, 0, 1, 1], [], []>} : vector<16x64xf32>, vector<64x32xf32>, vector<16x32xf32> -> vector<16x32xf32>
    %15 = vector.broadcast %13 : vector<16x1xf32> to vector<16x32xf32>
    %16 = arith.divf %14, %15 : vector<16x32xf32>
    %cst_15 = arith.constant dense<0.000000e+00> : vector<8xf32>
    %17 = vector.multi_reduction <add>, %3, %cst_15 [1] : vector<8x16xf32> to vector<8xf32>
    %18 = vector.shape_cast %17 : vector<8xf32> to vector<8x1xf32>
    %cst_16 = arith.constant 1.000000e+00 : f32
    %19 = vector.broadcast %cst_16 : f32 to vector<8x1xf32>
    %20 = arith.subf %18, %19 : vector<8x1xf32>
    %cst_17 = arith.constant 0.000000e+00 : f32
    %21 = vector.broadcast %cst_17 : f32 to vector<8x1xf32>
    %22 = arith.maximumf %20, %21 : vector<8x1xf32>
    %cst_18 = arith.constant 1.000000e+00 : f32
    %23 = vector.broadcast %cst_18 : f32 to vector<8x1xf32>
    %24 = arith.addf %22, %23 : vector<8x1xf32>
    %cst_19 = arith.constant dense<0.000000e+00> : vector<8x32xf32>
    %25 = tpu.matmul %3, %16, %cst_19 {dimension_numbers = #tpu.dot_dimension_numbers<[1], [0], [0], [1], [0, 0, 1, 1], [], []>} : vector<8x16xf32>, vector<16x32xf32>, vector<8x32xf32> -> vector<8x32xf32>
    %26 = vector.broadcast %24 : vector<8x1xf32> to vector<8x32xf32>
    %27 = arith.divf %25, %26 : vector<8x32xf32>
    %cst_20 = arith.constant dense<0.000000e+00> : vector<8x8xf32>
    %28 = tpu.matmul %27, %27, %cst_20 {dimension_numbers = #tpu.dot_dimension_numbers<[1], [1], [0], [0], [0, 0, 1, 0], [], []>} : vector<8x32xf32>, vector<8x32xf32>, vector<8x8xf32> -> vector<8x8xf32>
    %29 = arith.negf %28 : vector<8x8xf32>
    %30 = math.exp %29 : vector<8x8xf32>
    %cst_21 = arith.constant 1.000000e+00 : f32
    %31 = vector.broadcast %cst_21 : f32 to vector<8x8xf32>
    %32 = arith.addf %31, %30 : vector<8x8xf32>
    %33 = arith.divf %31, %32 : vector<8x8xf32>
    %c0_22 = arith.constant 0 : index
    %c0_23 = arith.constant 0 : index
    %34 = vector.load %arg6[%c0_22, %c0_23] : memref<32x32xf32, #tpu.memory_space<vmem>>, vector<32x32xf32>
    %c0_24 = arith.constant 0 : index
    %c0_25 = arith.constant 0 : index
    %35 = vector.load %arg7[%c0_24, %c0_25] : memref<1x32xf32, #tpu.memory_space<vmem>>, vector<1x32xf32>
    %cst_26 = arith.constant dense<0.000000e+00> : vector<8xf32>
    %36 = vector.multi_reduction <add>, %33, %cst_26 [1] : vector<8x8xf32> to vector<8xf32>
    %37 = vector.shape_cast %36 : vector<8xf32> to vector<8x1xf32>
    %cst_27 = arith.constant 2.000000e+00 : f32
    %38 = vector.broadcast %cst_27 : f32 to vector<8x1xf32>
    %39 = arith.addf %37, %38 : vector<8x1xf32>
    %40 = math.rsqrt %39 : vector<8x1xf32>
    %cst_28 = arith.constant dense<0.000000e+00> : vector<8x32xf32>
    %41 = tpu.matmul %27, %34, %cst_28 {dimension_numbers = #tpu.dot_dimension_numbers<[1], [0], [0], [1], [0, 0, 1, 1], [], []>} : vector<8x32xf32>, vector<32x32xf32>, vector<8x32xf32> -> vector<8x32xf32>
    %42 = vector.broadcast %40 : vector<8x1xf32> to vector<8x32xf32>
    %43 = arith.mulf %42, %41 : vector<8x32xf32>
    %cst_29 = arith.constant dense<0.000000e+00> : vector<8x32xf32>
    %44 = tpu.matmul %33, %43, %cst_29 {dimension_numbers = #tpu.dot_dimension_numbers<[1], [0], [0], [1], [0, 0, 1, 1], [], []>} : vector<8x8xf32>, vector<8x32xf32>, vector<8x32xf32> -> vector<8x32xf32>
    %cst_30 = arith.constant 2.000000e+00 : f32
    %45 = vector.broadcast %cst_30 : f32 to vector<8x32xf32>
    %46 = arith.mulf %45, %43 : vector<8x32xf32>
    %47 = arith.addf %44, %46 : vector<8x32xf32>
    %48 = vector.broadcast %40 : vector<8x1xf32> to vector<8x32xf32>
    %49 = arith.mulf %48, %47 : vector<8x32xf32>
    %50 = vector.broadcast %35 : vector<1x32xf32> to vector<8x32xf32>
    %51 = arith.addf %49, %50 : vector<8x32xf32>
    %cst_31 = arith.constant dense<0.000000e+00> : vector<8xf32>
    %52 = vector.multi_reduction <add>, %2, %cst_31 [0] : vector<16x8xf32> to vector<8xf32>
    %53 = vector.shape_cast %52 : vector<8xf32> to vector<1x8xf32>
    %cst_32 = arith.constant 1.000000e+00 : f32
    %54 = vector.broadcast %cst_32 : f32 to vector<1x8xf32>
    %55 = arith.subf %53, %54 : vector<1x8xf32>
    %cst_33 = arith.constant 0.000000e+00 : f32
    %56 = vector.broadcast %cst_33 : f32 to vector<1x8xf32>
    %57 = arith.maximumf %55, %56 : vector<1x8xf32>
    %cst_34 = arith.constant 1.000000e+00 : f32
    %58 = vector.broadcast %cst_34 : f32 to vector<1x8xf32>
    %59 = arith.addf %57, %58 : vector<1x8xf32>
    %60 = vector.broadcast %59 : vector<1x8xf32> to vector<16x8xf32>
    %61 = arith.divf %2, %60 : vector<16x8xf32>
    %cst_35 = arith.constant dense<0.000000e+00> : vector<16xf32>
    %62 = vector.multi_reduction <add>, %61, %cst_35 [1] : vector<16x8xf32> to vector<16xf32>
    %63 = vector.shape_cast %62 : vector<16xf32> to vector<16x1xf32>
    %cst_36 = arith.constant 1.000000e+00 : f32
    %64 = vector.broadcast %cst_36 : f32 to vector<16x1xf32>
    %65 = arith.subf %63, %64 : vector<16x1xf32>
    %cst_37 = arith.constant 0.000000e+00 : f32
    %66 = vector.broadcast %cst_37 : f32 to vector<16x1xf32>
    %67 = arith.maximumf %65, %66 : vector<16x1xf32>
    %cst_38 = arith.constant 1.000000e+00 : f32
    %68 = vector.broadcast %cst_38 : f32 to vector<16x1xf32>
    %69 = arith.addf %67, %68 : vector<16x1xf32>
    %cst_39 = arith.constant dense<0.000000e+00> : vector<16x32xf32>
    %70 = tpu.matmul %2, %51, %cst_39 {dimension_numbers = #tpu.dot_dimension_numbers<[1], [0], [0], [1], [0, 0, 1, 1], [], []>} : vector<16x8xf32>, vector<8x32xf32>, vector<16x32xf32> -> vector<16x32xf32>
    %71 = vector.broadcast %69 : vector<16x1xf32> to vector<16x32xf32>
    %72 = arith.divf %70, %71 : vector<16x32xf32>
    %c0_40 = arith.constant 0 : index
    %c0_41 = arith.constant 0 : index
    %73 = vector.load %arg10[%c0_40, %c0_41] : memref<2x32xf32, #tpu.memory_space<vmem>>, vector<2x32xf32>
    %74 = vector.extract_strided_slice %73 {offsets = [0, 0], sizes = [1, 32], strides = [1, 1]} : vector<2x32xf32> to vector<1x32xf32>
    %75 = vector.broadcast %74 : vector<1x32xf32> to vector<16x32xf32>
    %76 = arith.mulf %16, %75 : vector<16x32xf32>
    %cst_42 = arith.constant dense<0.000000e+00> : vector<16xf32>
    %77 = vector.multi_reduction <add>, %76, %cst_42 [1] : vector<16x32xf32> to vector<16xf32>
    %78 = vector.shape_cast %77 : vector<16xf32> to vector<16x1xf32>
    %79 = vector.extract_strided_slice %73 {offsets = [1, 0], sizes = [1, 32], strides = [1, 1]} : vector<2x32xf32> to vector<1x32xf32>
    %80 = vector.broadcast %79 : vector<1x32xf32> to vector<16x32xf32>
    %81 = arith.mulf %72, %80 : vector<16x32xf32>
    %cst_43 = arith.constant dense<0.000000e+00> : vector<16xf32>
    %82 = vector.multi_reduction <add>, %81, %cst_43 [1] : vector<16x32xf32> to vector<16xf32>
    %83 = vector.shape_cast %82 : vector<16xf32> to vector<16x1xf32>
    %84 = arith.addf %78, %83 : vector<16x1xf32>
    %c0_44 = arith.constant 0 : index
    %c0_45 = arith.constant 0 : index
    %85 = vector.load %arg11[%c0_44, %c0_45] : memref<1x1xf32, #tpu.memory_space<vmem>>, vector<1x1xf32>
    %86 = vector.broadcast %85 : vector<1x1xf32> to vector<16x1xf32>
    %87 = arith.addf %84, %86 : vector<16x1xf32>
    %88 = arith.negf %87 : vector<16x1xf32>
    %89 = math.exp %88 : vector<16x1xf32>
    %cst_46 = arith.constant 1.000000e+00 : f32
    %90 = vector.broadcast %cst_46 : f32 to vector<16x1xf32>
    %91 = arith.addf %90, %89 : vector<16x1xf32>
    %92 = arith.divf %90, %91 : vector<16x1xf32>
    %93 = vector.shape_cast %92 : vector<16x1xf32> to vector<16x1xf32>
    %94 = vector.broadcast %93 : vector<16x1xf32> to vector<16x128xf32>
    %c0_47 = arith.constant 0 : index
    %c0_48 = arith.constant 0 : index
    %95 = vector.load %arg18[%c0_47, %c0_48] : memref<16x128xf32, #tpu.memory_space<vmem>>, vector<16x128xf32>
    tpu.vector_store %arg18[%c0_47, %c0_48], %94 {strides = array<i32>} : memref<16x128xf32, #tpu.memory_space<vmem>>, vector<16x128xf32>,
    %cst_49 = arith.constant 1.500000e-01 : f32
    %96 = vector.broadcast %cst_49 : f32 to vector<16x32xf32>
    %97 = arith.mulf %96, %72 : vector<16x32xf32>
    %98 = arith.addf %16, %97 : vector<16x32xf32>
    %99 = tpu.iota {dimensions = array<i32: 0>} : vector<16x16xi32>
    %100 = tpu.iota {dimensions = array<i32: 1>} : vector<16x16xi32>
    %101 = arith.cmpi eq, %99, %100 : vector<16x16xi32>
    %cst_50 = arith.constant 1.000000e+04 : f32
    %102 = vector.broadcast %cst_50 : f32 to vector<16x16xf32>
    %103 = arith.subf %5, %102 : vector<16x16xf32>
    %104 = arith.select %101, %103, %5 : vector<16x16xi1>, vector<16x16xf32>
    %cst_51 = arith.constant 0.000000e+00 : f32
    %105 = vector.broadcast %cst_51 : f32 to vector<16x16xf32>
    %106 = arith.maximumf %104, %105 : vector<16x16xf32>
    %c0_52 = arith.constant 0 : index
    %c0_53 = arith.constant 0 : index
    %107 = vector.load %arg8[%c0_52, %c0_53] : memref<32x32xf32, #tpu.memory_space<vmem>>, vector<32x32xf32>
    %c0_54 = arith.constant 0 : index
    %c0_55 = arith.constant 0 : index
    %108 = vector.load %arg9[%c0_54, %c0_55] : memref<1x32xf32, #tpu.memory_space<vmem>>, vector<1x32xf32>
    %cst_56 = arith.constant dense<0.000000e+00> : vector<16xf32>
    %109 = vector.multi_reduction <add>, %106, %cst_56 [1] : vector<16x16xf32> to vector<16xf32>
    %110 = vector.shape_cast %109 : vector<16xf32> to vector<16x1xf32>
    %cst_57 = arith.constant 2.000000e+00 : f32
    %111 = vector.broadcast %cst_57 : f32 to vector<16x1xf32>
    %112 = arith.addf %110, %111 : vector<16x1xf32>
    %113 = math.rsqrt %112 : vector<16x1xf32>
    %cst_58 = arith.constant dense<0.000000e+00> : vector<16x32xf32>
    %114 = tpu.matmul %98, %107, %cst_58 {dimension_numbers = #tpu.dot_dimension_numbers<[1], [0], [0], [1], [0, 0, 1, 1], [], []>} : vector<16x32xf32>, vector<32x32xf32>, vector<16x32xf32> -> vector<16x32xf32>
    %115 = vector.broadcast %113 : vector<16x1xf32> to vector<16x32xf32>
    %116 = arith.mulf %115, %114 : vector<16x32xf32>
    %cst_59 = arith.constant dense<0.000000e+00> : vector<16x32xf32>
    %117 = tpu.matmul %106, %116, %cst_59 {dimension_numbers = #tpu.dot_dimension_numbers<[1], [0], [0], [1], [0, 0, 1, 1], [], []>} : vector<16x16xf32>, vector<16x32xf32>, vector<16x32xf32> -> vector<16x32xf32>
    %cst_60 = arith.constant 2.000000e+00 : f32
    %118 = vector.broadcast %cst_60 : f32 to vector<16x32xf32>
    %119 = arith.mulf %118, %116 : vector<16x32xf32>
    %120 = arith.addf %117, %119 : vector<16x32xf32>
    %121 = vector.broadcast %113 : vector<16x1xf32> to vector<16x32xf32>
    %122 = arith.mulf %121, %120 : vector<16x32xf32>
    %123 = vector.broadcast %108 : vector<1x32xf32> to vector<16x32xf32>
    %124 = arith.addf %122, %123 : vector<16x32xf32>
    %cst_61 = arith.constant dense<0.000000e+00> : vector<64x32xf32>
    %125 = tpu.matmul %0, %124, %cst_61 {dimension_numbers = #tpu.dot_dimension_numbers<[1], [0], [0], [1], [0, 0, 1, 1], [], []>} : vector<64x16xf32>, vector<16x32xf32>, vector<64x32xf32> -> vector<64x32xf32>
    %c0_62 = arith.constant 0 : index
    %c0_63 = arith.constant 0 : index
    %126 = vector.load %arg12[%c0_62, %c0_63] : memref<2x32xf32, #tpu.memory_space<vmem>>, vector<2x32xf32>
    %127 = vector.extract_strided_slice %126 {offsets = [0, 0], sizes = [1, 32], strides = [1, 1]} : vector<2x32xf32> to vector<1x32xf32>
    %128 = vector.broadcast %127 : vector<1x32xf32> to vector<64x32xf32>
    %129 = arith.mulf %4, %128 : vector<64x32xf32>
    %cst_64 = arith.constant dense<0.000000e+00> : vector<64xf32>
    %130 = vector.multi_reduction <add>, %129, %cst_64 [1] : vector<64x32xf32> to vector<64xf32>
    %131 = vector.shape_cast %130 : vector<64xf32> to vector<64x1xf32>
    %132 = vector.extract_strided_slice %126 {offsets = [1, 0], sizes = [1, 32], strides = [1, 1]} : vector<2x32xf32> to vector<1x32xf32>
    %133 = vector.broadcast %132 : vector<1x32xf32> to vector<64x32xf32>
    %134 = arith.mulf %125, %133 : vector<64x32xf32>
    %cst_65 = arith.constant dense<0.000000e+00> : vector<64xf32>
    %135 = vector.multi_reduction <add>, %134, %cst_65 [1] : vector<64x32xf32> to vector<64xf32>
    %136 = vector.shape_cast %135 : vector<64xf32> to vector<64x1xf32>
    %137 = arith.addf %131, %136 : vector<64x1xf32>
    %c0_66 = arith.constant 0 : index
    %c0_67 = arith.constant 0 : index
    %138 = vector.load %arg13[%c0_66, %c0_67] : memref<1x1xf32, #tpu.memory_space<vmem>>, vector<1x1xf32>
    %139 = vector.broadcast %138 : vector<1x1xf32> to vector<64x1xf32>
    %140 = arith.addf %137, %139 : vector<64x1xf32>
    %141 = arith.negf %140 : vector<64x1xf32>
    %142 = math.exp %141 : vector<64x1xf32>
    %cst_68 = arith.constant 1.000000e+00 : f32
    %143 = vector.broadcast %cst_68 : f32 to vector<64x1xf32>
    %144 = arith.addf %143, %142 : vector<64x1xf32>
    %145 = arith.divf %143, %144 : vector<64x1xf32>
    %146 = vector.shape_cast %145 : vector<64x1xf32> to vector<64x1xf32>
    %147 = vector.broadcast %146 : vector<64x1xf32> to vector<64x128xf32>
    %c0_69 = arith.constant 0 : index
    %c0_70 = arith.constant 0 : index
    %148 = vector.load %arg19[%c0_69, %c0_70] : memref<64x128xf32, #tpu.memory_space<vmem>>, vector<64x128xf32>
    tpu.vector_store %arg19[%c0_69, %c0_70], %147 {strides = array<i32>} : memref<64x128xf32, #tpu.memory_space<vmem>>, vector<64x128xf32>,
    %cst_71 = arith.constant 5.000000e-01 : f32
    %149 = vector.broadcast %cst_71 : f32 to vector<64x32xf32>
    %150 = arith.mulf %149, %125 : vector<64x32xf32>
    %151 = arith.addf %4, %150 : vector<64x32xf32>
    %c0_72 = arith.constant 0 : index
    %c0_73 = arith.constant 0 : index
    %152 = vector.load %arg14[%c0_72, %c0_73] : memref<64x64xf32, #tpu.memory_space<vmem>>, vector<64x64xf32>
    %c0_74 = arith.constant 0 : index
    %c0_75 = arith.constant 0 : index
    %153 = vector.load %arg15[%c0_74, %c0_75] : memref<32x32xf32, #tpu.memory_space<vmem>>, vector<32x32xf32>
    %cst_76 = arith.constant dense<0.000000e+00> : vector<64x32xf32>
    %154 = tpu.matmul %151, %153, %cst_76 {dimension_numbers = #tpu.dot_dimension_numbers<[1], [0], [0], [1], [0, 0, 1, 1], [], []>} : vector<64x32xf32>, vector<32x32xf32>, vector<64x32xf32> -> vector<64x32xf32>
    %c0_77 = arith.constant 0 : index
    %c0_78 = arith.constant 0 : index
    %155 = vector.load %arg16[%c0_77, %c0_78] : memref<2x32xf32, #tpu.memory_space<vmem>>, vector<2x32xf32>
    %156 = vector.extract_strided_slice %155 {offsets = [0, 0], sizes = [1, 32], strides = [1, 1]} : vector<2x32xf32> to vector<1x32xf32>
    %cst_79 = arith.constant dense<0.000000e+00> : vector<64x1xf32>
    %157 = tpu.matmul %154, %156, %cst_79 {dimension_numbers = #tpu.dot_dimension_numbers<[1], [1], [0], [0], [0, 0, 1, 0], [], []>} : vector<64x32xf32>, vector<1x32xf32>, vector<64x1xf32> -> vector<64x1xf32>
    %158 = vector.extract_strided_slice %155 {offsets = [1, 0], sizes = [1, 32], strides = [1, 1]} : vector<2x32xf32> to vector<1x32xf32>
    %cst_80 = arith.constant dense<0.000000e+00> : vector<1x64xf32>
    %159 = tpu.matmul %158, %154, %cst_80 {dimension_numbers = #tpu.dot_dimension_numbers<[1], [1], [0], [0], [0, 0, 1, 0], [], []>} : vector<1x32xf32>, vector<64x32xf32>, vector<1x64xf32> -> vector<1x64xf32>
    %160 = vector.broadcast %157 : vector<64x1xf32> to vector<64x64xf32>
    %161 = vector.broadcast %159 : vector<1x64xf32> to vector<64x64xf32>
    %162 = arith.addf %160, %161 : vector<64x64xf32>
    %cst_81 = arith.constant 0.000000e+00 : f32
    %163 = vector.broadcast %cst_81 : f32 to vector<64x64xf32>
    %164 = arith.cmpf ogt, %162, %163 : vector<64x64xf32>
    %cst_82 = arith.constant 2.000000e-01 : f32
    %165 = vector.broadcast %cst_82 : f32 to vector<64x64xf32>
    %166 = arith.mulf %165, %162 : vector<64x64xf32>
    %167 = arith.select %164, %162, %166 : vector<64x64xi1>, vector<64x64xf32>
    %cst_83 = arith.constant 0.000000e+00 : f32
    %168 = vector.broadcast %cst_83 : f32 to vector<64x64xf32>
    %169 = arith.cmpf one, %152, %168 : vector<64x64xf32>
    %cst_84 = arith.constant -1.000000e+30 : f32
    %170 = vector.broadcast %cst_84 : f32 to vector<64x64xf32>
    %171 = arith.select %169, %167, %170 : vector<64x64xi1>, vector<64x64xf32>
    %cst_85 = arith.constant dense<0xFF800000> : vector<64xf32>
    %172 = vector.multi_reduction <maximumf>, %171, %cst_85 [1] : vector<64x64xf32> to vector<64xf32>
    %173 = vector.shape_cast %172 : vector<64xf32> to vector<64x1xf32>
    %174 = vector.broadcast %173 : vector<64x1xf32> to vector<64x64xf32>
    %175 = arith.subf %167, %174 : vector<64x64xf32>
    %176 = math.exp %175 : vector<64x64xf32>
    %cst_86 = arith.constant 0.000000e+00 : f32
    %177 = vector.broadcast %cst_86 : f32 to vector<64x64xf32>
    %178 = arith.select %169, %176, %177 : vector<64x64xi1>, vector<64x64xf32>
    %cst_87 = arith.constant dense<0.000000e+00> : vector<64xf32>
    %179 = vector.multi_reduction <add>, %178, %cst_87 [1] : vector<64x64xf32> to vector<64xf32>
    %180 = vector.shape_cast %179 : vector<64xf32> to vector<64x1xf32>
    %cst_88 = arith.constant dense<0.000000e+00> : vector<64x32xf32>
    %181 = tpu.matmul %178, %154, %cst_88 {dimension_numbers = #tpu.dot_dimension_numbers<[1], [0], [0], [1], [0, 0, 1, 1], [], []>} : vector<64x64xf32>, vector<64x32xf32>, vector<64x32xf32> -> vector<64x32xf32>
    %cst_89 = arith.constant 1.000000e-15 : f32
    %182 = vector.broadcast %cst_89 : f32 to vector<64x1xf32>
    %183 = arith.addf %180, %182 : vector<64x1xf32>
    %184 = vector.broadcast %183 : vector<64x1xf32> to vector<64x32xf32>
    %185 = arith.divf %181, %184 : vector<64x32xf32>
    %cst_90 = arith.constant 0.000000e+00 : f32
    %186 = vector.broadcast %cst_90 : f32 to vector<64x32xf32>
    %187 = arith.cmpf ogt, %185, %186 : vector<64x32xf32>
    %188 = math.exp %185 : vector<64x32xf32>
    %cst_91 = arith.constant 1.000000e+00 : f32
    %189 = vector.broadcast %cst_91 : f32 to vector<64x32xf32>
    %190 = arith.subf %188, %189 : vector<64x32xf32>
    %191 = arith.select %187, %185, %190 : vector<64x32xi1>, vector<64x32xf32>
    %c0_92 = arith.constant 0 : index
    %c0_93 = arith.constant 0 : index
    %192 = vector.load %arg17[%c0_92, %c0_93] : memref<64x32xf32, #tpu.memory_space<vmem>>, vector<64x32xf32>
    tpu.vector_store %arg17[%c0_92, %c0_93], %191 {strides = array<i32>} : memref<64x32xf32, #tpu.memory_space<vmem>>, vector<64x32xf32>,
    return
  }
}

</mosaic_0001>

<llo_original>
// kernel: tpu_custom_call.1
$region0: #{tpu_custom_call.1}
  #allocation0 [shape = 'u32[]', space=smem, size = 0x4, offset = 0x4, fixed_abs, tag = 'smem constant byte address 0x4 - core index']
  #allocation1 [shape = 'u32[144,128]{1,0:T(1,128)}', space=vmem, size = 0x12000, scoped, tag = 'internal scratch']
  #allocation2 [shape = 'f32[1,1]{1,0:T(1,128)S(1)}', space=vmem, size = 0x200, scoped, tag = 'scoped memory for tpu_custom_call.1']
  #allocation3 [shape = 'f32[1,1]{1,0:T(1,128)S(1)}', space=vmem, size = 0x200, scoped, tag = 'scoped memory for tpu_custom_call.1']
  %s0 = inlined_call_operand.vmem [shape: f32[64,16], index: 0, kind: input, shape index: {}]
  %s1 = inlined_call_operand.vmem [shape: f32[16,64], index: 1, kind: input, shape index: {}]
  %s2 = inlined_call_operand.vmem [shape: f32[16,8], index: 2, kind: input, shape index: {}]
  %s3 = inlined_call_operand.hbm [shape: f32[8,16], index: 3, kind: input, shape index: {}]
  %s4 = inlined_call_operand.vmem [shape: f32[64,32], index: 4, kind: input, shape index: {}]
  %s5 = inlined_call_operand.vmem [shape: f32[16,16], index: 5, kind: input, shape index: {}]
  %s6 = inlined_call_operand.vmem [shape: f32[32,32], index: 6, kind: input, shape index: {}]
  %s7 = inlined_call_operand.vmem [shape: f32[1,32], index: 7, kind: input, shape index: {}]
  %s8 = inlined_call_operand.vmem [shape: f32[32,32], index: 8, kind: input, shape index: {}]
  %s9 = inlined_call_operand.vmem [shape: f32[1,32], index: 9, kind: input, shape index: {}]
  %s10 = inlined_call_operand.vmem [shape: f32[2,32], index: 10, kind: input, shape index: {}]
  %s11 = inlined_call_operand.<no memory space> [shape: f32[1,1], index: 11, kind: input, shape index: {}]
  %s12 = inlined_call_operand.vmem [shape: f32[2,32], index: 12, kind: input, shape index: {}]
  %s13 = inlined_call_operand.<no memory space> [shape: f32[1,1], index: 13, kind: input, shape index: {}]
  %s14 = inlined_call_operand.vmem [shape: f32[64,64], index: 14, kind: input, shape index: {}]
  %s15 = inlined_call_operand.vmem [shape: f32[32,32], index: 15, kind: input, shape index: {}]
  %s16 = inlined_call_operand.vmem [shape: f32[2,32], index: 16, kind: input, shape index: {}]
  %s17 = inlined_call_operand.vmem [shape: f32[64,32], index: 17, kind: output, shape index: {0}]
  %s18 = inlined_call_operand.hbm [shape: f32[16,128], index: 18, kind: output, shape index: {1}]
  %s19 = inlined_call_operand.hbm [shape: f32[64,128], index: 19, kind: output, shape index: {2}]
  %20 = xla_tuple %s17, %s18, %s19
  %s21 = sld [smem:[#allocation0]]
  $region98: #{tpu_custom_call.1} parent=0
    _
  %s23 = ssub.s32 1, %s21
  %s24 = scalar_select 0, %s23, %s21
  %v25 = vstv %s11
  %26 = vst [vmem:[#allocation2] sm:$0x1] %v25
  %v27 = vstv %s13
  %28 = vst [vmem:[#allocation3] sm:$0x1] %v27
  $region1: #{tpu_custom_call.1} parent=0
    #allocation4 [shape = 'u8[4096]{0}', space=vmem, size = 0x1000, scoped, tag = 'input window, operand 3, single buffered']
    #allocation5 [shape = 's32[1]{0}', space=sflag, size = 0x4, scoped, tag = 'scoped memory for tpu_custom_call.1']
    #allocation6 [shape = 's32[1]{0}', space=sflag, size = 0x4, scoped, tag = 'scoped memory for tpu_custom_call.1']
    #allocation7 [shape = 'u8[8192]{0}', space=vmem, size = 0x2000, scoped, tag = 'output window, operand 1, single buffered']
    #allocation8 [shape = 'u8[32768]{0}', space=vmem, size = 0x8000, scoped, tag = 'output window, operand 2, single buffered']
    #allocation9 [shape = 's32[1]{0}', space=sflag, size = 0x4, scoped, tag = 'scoped memory for tpu_custom_call.1']
    %29 = vsyncpa [#allocation5], 0
    %30 = vsyncpa [#allocation6], 0
    %31 = vsyncpa [#allocation9], 0
    // Predicated region
    $region2: #{tpu_custom_call.1} parent=1 // pred_check
      _
    $region3: #{tpu_custom_call.1} parent=1 // pred_check_branch
      %33 = sbr.rel (0) target = $region5
    $region4: #{tpu_custom_call.1} parent=1 // pred_region
      _
    $region5: #{tpu_custom_call.1} parent=1 // pred_fallthru
      _
    // Predicated region
    $region6: #{tpu_custom_call.1} parent=1 // pred_check
      _
    $region7: #{tpu_custom_call.1} parent=1 // pred_check_branch
      %35 = sbr.rel (0) target = $region9
    $region8: #{tpu_custom_call.1} parent=1 // pred_region
      _
    $region9: #{tpu_custom_call.1} parent=1 // pred_fallthru
      _
    // Predicated region
    $region10: #{tpu_custom_call.1} parent=1 // pred_check
      _
    $region11: #{tpu_custom_call.1} parent=1 // pred_check_branch
      %37 = sbr.rel (0) target = $region13
    $region12: #{tpu_custom_call.1} parent=1 // pred_region
      _
    $region13: #{tpu_custom_call.1} parent=1 // pred_fallthru
      _
    // Predicated region
    $region14: #{tpu_custom_call.1} parent=1 // pred_check
      _
    $region15: #{tpu_custom_call.1} parent=1 // pred_check_branch
      %39 = sbr.rel (0) target = $region17
    $region16: #{tpu_custom_call.1} parent=1 // pred_region
      %s41 = ssub.s32 128, 128
      %42 = vsyncadd [#allocation5], %s41
      %s44 = sshll.u32 [#allocation4], 4
      %s45 = int_to_ptr.vmem [resolvable:$true] %s44
      %47 = dma.hbm_to_vmem [thread:$0]  %s3, 128, %s45, [#allocation5]
    $region17: #{tpu_custom_call.1} parent=1 // pred_fallthru
      _
    // Predicated region
    $region18: #{tpu_custom_call.1} parent=1 // pred_check
      _
    $region19: #{tpu_custom_call.1} parent=1 // pred_check_branch
      %49 = sbr.rel (0) target = $region21
    $region20: #{tpu_custom_call.1} parent=1 // pred_region
      _
    $region21: #{tpu_custom_call.1} parent=1 // pred_fallthru
      _
    // Predicated region
    $region22: #{tpu_custom_call.1} parent=1 // pred_check
      _
    $region23: #{tpu_custom_call.1} parent=1 // pred_check_branch
      %51 = sbr.rel (0) target = $region25
    $region24: #{tpu_custom_call.1} parent=1 // pred_region
      _
    $region25: #{tpu_custom_call.1} parent=1 // pred_fallthru
      _
    // Predicated region
    $region26: #{tpu_custom_call.1} parent=1 // pred_check
      _
    $region27: #{tpu_custom_call.1} parent=1 // pred_check_branch
      %53 = sbr.rel (0) target = $region29
    $region28: #{tpu_custom_call.1} parent=1 // pred_region
      _
    $region29: #{tpu_custom_call.1} parent=1 // pred_fallthru
      _
    // Predicated region
    $region30: #{tpu_custom_call.1} parent=1 // pred_check
      _
    $region31: #{tpu_custom_call.1} parent=1 // pred_check_branch
      %55 = sbr.rel (0) target = $region33
    $region32: #{tpu_custom_call.1} parent=1 // pred_region
      _
    $region33: #{tpu_custom_call.1} parent=1 // pred_fallthru
      _
    // Predicated region
    $region34: #{tpu_custom_call.1} parent=1 // pred_check
      _
    $region35: #{tpu_custom_call.1} parent=1 // pred_check_branch
      %57 = sbr.rel (0) target = $region37
    $region36: #{tpu_custom_call.1} parent=1 // pred_region
      _
    $region37: #{tpu_custom_call.1} parent=1 // pred_fallthru
      _
    // Predicated region
    $region38: #{tpu_custom_call.1} parent=1 // pred_check
      _
    $region39: #{tpu_custom_call.1} parent=1 // pred_check_branch
      %59 = sbr.rel (0) target = $region41
    $region40: #{tpu_custom_call.1} parent=1 // pred_region
      _
    $region41: #{tpu_custom_call.1} parent=1 // pred_fallthru
      _
    // Predicated region
    $region42: #{tpu_custom_call.1} parent=1 // pred_check
      _
    $region43: #{tpu_custom_call.1} parent=1 // pred_check_branch
      %61 = sbr.rel (0) target = $region45
    $region44: #{tpu_custom_call.1} parent=1 // pred_region
      _
    $region45: #{tpu_custom_call.1} parent=1 // pred_fallthru
      _
    // Predicated region
    $region46: #{tpu_custom_call.1} parent=1 // pred_check
      _
    $region47: #{tpu_custom_call.1} parent=1 // pred_check_branch
      %63 = sbr.rel (0) target = $region49
    $region48: #{tpu_custom_call.1} parent=1 // pred_region
      _
    $region49: #{tpu_custom_call.1} parent=1 // pred_fallthru
      _
    // Predicated region
    $region50: #{tpu_custom_call.1} parent=1 // pred_check
      _
    $region51: #{tpu_custom_call.1} parent=1 // pred_check_branch
      %65 = sbr.rel (0) target = $region53
    $region52: #{tpu_custom_call.1} parent=1 // pred_region
      _
    $region53: #{tpu_custom_call.1} parent=1 // pred_fallthru
      _
    // Predicated region
    $region54: #{tpu_custom_call.1} parent=1 // pred_check
      _
    $region55: #{tpu_custom_call.1} parent=1 // pred_check_branch
      %67 = sbr.rel (0) target = $region57
    $region56: #{tpu_custom_call.1} parent=1 // pred_region
      _
    $region57: #{tpu_custom_call.1} parent=1 // pred_fallthru
      _
    // Predicated region
    $region58: #{tpu_custom_call.1} parent=1 // pred_check
      _
    $region59: #{tpu_custom_call.1} parent=1 // pred_check_branch
      %69 = sbr.rel (0) target = $region61
    $region60: #{tpu_custom_call.1} parent=1 // pred_region
      _
    $region61: #{tpu_custom_call.1} parent=1 // pred_fallthru
      _
    // Predicated region
    $region62: #{tpu_custom_call.1} parent=1 // pred_check
      _
    $region63: #{tpu_custom_call.1} parent=1 // pred_check_branch
      %71 = sbr.rel (0) target = $region65
    $region64: #{tpu_custom_call.1} parent=1 // pred_region
      _
    $region65: #{tpu_custom_call.1} parent=1 // pred_fallthru
      _
    // Predicated region
    $region66: #{tpu_custom_call.1} parent=1 // pred_check
      _
    $region67: #{tpu_custom_call.1} parent=1 // pred_check_branch
      %73 = sbr.rel (0) target = $region69
    $region68: #{tpu_custom_call.1} parent=1 // pred_region
      _
    $region69: #{tpu_custom_call.1} parent=1 // pred_fallthru
      _
    // Predicated region
    $region70: #{tpu_custom_call.1} parent=1 // pred_check
      _
    $region71: #{tpu_custom_call.1} parent=1 // pred_check_branch
      %75 = sbr.rel (0) target = $region73
    $region72: #{tpu_custom_call.1} parent=1 // pred_region
      %76 = dma.done [#allocation5], 128
    $region73: #{tpu_custom_call.1} parent=1 // pred_fallthru
      _
    %v77 = vld [vmem:[%s0] sm:$0xff]
    %v78 = vld [vmem:[%s0 + $0x8] sm:$0xff]
    %v79 = vld [vmem:[%s0 + $0x10] sm:$0xff]
    %v80 = vld [vmem:[%s0 + $0x18] sm:$0xff]
    %v81 = vld [vmem:[%s0 + $0x20] sm:$0xff]
    %v82 = vld [vmem:[%s0 + $0x28] sm:$0xff]
    %v83 = vld [vmem:[%s0 + $0x30] sm:$0xff]
    %v84 = vld [vmem:[%s0 + $0x38] sm:$0xff]
    %v85 = vld [vmem:[%s1] sm:$0xff]
    %v86 = vld [vmem:[%s1 + $0x8] sm:$0xff]
    %v87 = vld [vmem:[%s2] sm:$0xff]
    %v88 = vld [vmem:[%s2 + $0x8] sm:$0xff]
    %v89 = vld [vmem:[#allocation4] sm:$0xff]
    %v90 = vld [vmem:[%s4] sm:$0xff]
    %v91 = vld [vmem:[%s4 + $0x8] sm:$0xff]
    %v92 = vld [vmem:[%s4 + $0x10] sm:$0xff]
    %v93 = vld [vmem:[%s4 + $0x18] sm:$0xff]
    %v94 = vld [vmem:[%s4 + $0x20] sm:$0xff]
    %v95 = vld [vmem:[%s4 + $0x28] sm:$0xff]
    %v96 = vld [vmem:[%s4 + $0x30] sm:$0xff]
    %v97 = vld [vmem:[%s4 + $0x38] sm:$0xff]
    %v98 = vld [vmem:[%s5] sm:$0xff]
    %v99 = vld [vmem:[%s5 + $0x8] sm:$0xff]
    %vm100 = vcmask 523264
    %v101 = vsel %vm100, %v85, 0.0
    %102 = vadd.xlane.f32.xlu0 %v101
    %v103 = vpop.xlane.xlu0 %102
    %v104 = vsel %vm100, %v86, 0.0
    %105 = vadd.xlane.f32.xlu0 %v104
    %v106 = vpop.xlane.xlu0 %105
    %v107 = vsub.f32 %v103, 1.0
    %v108 = vsub.f32 %v106, 1.0
    %v109 = vmax.f32 %v107, 0.0
    %v110 = vmax.f32 %v108, 0.0
    %v111 = vadd.f32 %v109, 1.0
    %v112 = vadd.f32 %v110, 1.0
    %v114 = vsel %vm100, %v85, 0
    %v117 = vsel %vm100, %v86, 0
    %119 = vmatprep.subr.mxu0 0.0
    %120 = vmatpush1.msra.mxu0 %v90
    %121 = vmatprep.subr.mxu0 0.0
    %122 = vmatpush1.msra.mxu0 %v91
    %123 = vmatprep.subr.mxu0 0.0
    %124 = vmatpush1.msra.mxu0 %v92
    %125 = vmatprep.subr.mxu0 0.0
    %126 = vmatpush1.msra.mxu0 %v93
    %127 = vmatprep.subr.mxu0 0.0
    %128 = vmatpush1.msra.mxu0 %v94
    %129 = vmatprep.subr.mxu0 0.0
    %130 = vmatpush1.msra.mxu0 %v95
    %131 = vmatprep.subr.mxu0 0.0
    %132 = vmatpush1.msra.mxu0 %v96
    %133 = vmatprep.subr.mxu0 0.0
    %134 = vmatpush1.msra.mxu0 %v97
    %135 = vmatprep.subr.mxu0 0.0
    %136 = vmatpush1.msra.mxu0 0.0
    %137 = vmatprep.subr.mxu0 0.0
    %138 = vmatpush1.msra.mxu0 0.0
    %139 = vmatprep.subr.mxu0 0.0
    %140 = vmatpush1.msra.mxu0 0.0
    %141 = vmatprep.subr.mxu0 0.0
    %142 = vmatpush1.msra.mxu0 0.0
    %143 = vmatprep.subr.mxu0 0.0
    %144 = vmatpush1.msra.mxu0 0.0
    %145 = vmatprep.subr.mxu0 0.0
    %146 = vmatpush1.msra.mxu0 0.0
    %147 = vmatprep.subr.mxu0 0.0
    %148 = vmatpush1.msra.mxu0 0.0
    %149 = vmatprep.subr.mxu0 0.0
    %150 = vmatpush1.msra.mxu0 0.0
    %151 = vmatprep.subr.mxu0 0.0
    %152 = vmatpush1.msra.mxu0 0.0
    %153 = vmatprep.subr.mxu0 0.0
    %154 = vmatpush1.msra.mxu0 0.0
    %155 = vmatprep.subr.mxu0 0.0
    %156 = vmatpush1.msra.mxu0 0.0
    %157 = vmatprep.subr.mxu0 0.0
    %158 = vmatpush1.msra.mxu0 0.0
    %159 = vmatprep.subr.mxu0 0.0
    %160 = vmatpush1.msra.mxu0 0.0
    %161 = vmatprep.subr.mxu0 0.0
    %162 = vmatpush1.msra.mxu0 0.0
    %163 = vmatprep.subr.mxu0 0.0
    %164 = vmatpush1.msra.mxu0 0.0
    %165 = vmatprep.subr.mxu0 0.0
    %166 = vmatpush1.msra.mxu0 0.0
    %167 = vmatprep.subr.mxu0 0.0
    %168 = vmatpush1.msra.mxu0 0.0
    %169 = vmatprep.subr.mxu0 0.0
    %170 = vmatpush1.msra.mxu0 0.0
    %171 = vmatprep.subr.mxu0 0.0
    %172 = vmatpush1.msra.mxu0 0.0
    %173 = vmatprep.subr.mxu0 0.0
    %174 = vmatpush1.msra.mxu0 0.0
    %175 = vmatprep.subr.mxu0 0.0
    %176 = vmatpush1.msra.mxu0 0.0
    %177 = vmatprep.subr.mxu0 0.0
    %178 = vmatpush1.msra.mxu0 0.0
    %179 = vmatprep.subr.mxu0 0.0
    %180 = vmatpush1.msra.mxu0 0.0
    %181 = vmatprep.subr.mxu0 0.0
    %182 = vmatpush1.msra.mxu0 0.0
    %183 = vmatprep.mubr.f32.mxu0 0.0
    %184 = vmatmul.mubr.f32.gmra.mrb[0].mxu0 %v114
    %v185 = vpop.f32.mrb[0].mxu0
    %v186 = vadd.f32 0.0, %v185
    %v187 = vpop.f32.mrb[0].mxu0
    %188 = vmatprep.mubr.f32.mxu0 0.0
    %189 = vmatmul.mubr.f32.gmra.mrb[0].mxu0 %v117
    %v190 = vpop.f32.mrb[0].mxu0
    %v191 = vadd.f32 0.0, %v190
    %v192 = vpop.f32.mrb[0].mxu0
    %193 = vdwg.mxu0
    %v194 = vrcp.pop %v111
    %v195 = vmul.f32 %v186, %v194
    %v196 = vrcp.pop %v112
    %v197 = vmul.f32 %v191, %v196
    %vm198 = vcmask 130048
    %v199 = vsel %vm198, %v89, 0.0
    %200 = vadd.xlane.f32.xlu0 %v199
    %v201 = vpop.xlane.xlu0 %200
    %v202 = vsub.f32 %v201, 1.0
    %v203 = vmax.f32 %v202, 0.0
    %v204 = vadd.f32 %v203, 1.0
    %v206 = vsel %vm198, %v89, 0
    %208 = vmatprep.subr.mxu0 0.0
    %209 = vmatpush1.msra.mxu0 %v195
    %210 = vmatprep.subr.mxu0 0.0
    %211 = vmatpush1.msra.mxu0 %v197
    %212 = vmatprep.subr.mxu0 0.0
    %213 = vmatpush1.msra.mxu0 0.0
    %214 = vmatprep.subr.mxu0 0.0
    %215 = vmatpush1.msra.mxu0 0.0
    %216 = vmatprep.subr.mxu0 0.0
    %217 = vmatpush1.msra.mxu0 0.0
    %218 = vmatprep.subr.mxu0 0.0
    %219 = vmatpush1.msra.mxu0 0.0
    %220 = vmatprep.subr.mxu0 0.0
    %221 = vmatpush1.msra.mxu0 0.0
    %222 = vmatprep.subr.mxu0 0.0
    %223 = vmatpush1.msra.mxu0 0.0
    %224 = vmatprep.subr.mxu0 0.0
    %225 = vmatpush1.msra.mxu0 0.0
    %226 = vmatprep.subr.mxu0 0.0
    %227 = vmatpush1.msra.mxu0 0.0
    %228 = vmatprep.subr.mxu0 0.0
    %229 = vmatpush1.msra.mxu0 0.0
    %230 = vmatprep.subr.mxu0 0.0
    %231 = vmatpush1.msra.mxu0 0.0
    %232 = vmatprep.subr.mxu0 0.0
    %233 = vmatpush1.msra.mxu0 0.0
    %234 = vmatprep.subr.mxu0 0.0
    %235 = vmatpush1.msra.mxu0 0.0
    %236 = vmatprep.subr.mxu0 0.0
    %237 = vmatpush1.msra.mxu0 0.0
    %238 = vmatprep.subr.mxu0 0.0
    %239 = vmatpush1.msra.mxu0 0.0
    %240 = vmatprep.subr.mxu0 0.0
    %241 = vmatpush1.msra.mxu0 0.0
    %242 = vmatprep.subr.mxu0 0.0
    %243 = vmatpush1.msra.mxu0 0.0
    %244 = vmatprep.subr.mxu0 0.0
    %245 = vmatpush1.msra.mxu0 0.0
    %246 = vmatprep.subr.mxu0 0.0
    %247 = vmatpush1.msra.mxu0 0.0
    %248 = vmatprep.subr.mxu0 0.0
    %249 = vmatpush1.msra.mxu0 0.0
    %250 = vmatprep.subr.mxu0 0.0
    %251 = vmatpush1.msra.mxu0 0.0
    %252 = vmatprep.subr.mxu0 0.0
    %253 = vmatpush1.msra.mxu0 0.0
    %254 = vmatprep.subr.mxu0 0.0
    %255 = vmatpush1.msra.mxu0 0.0
    %256 = vmatprep.subr.mxu0 0.0
    %257 = vmatpush1.msra.mxu0 0.0
    %258 = vmatprep.subr.mxu0 0.0
    %259 = vmatpush1.msra.mxu0 0.0
    %260 = vmatprep.subr.mxu0 0.0
    %261 = vmatpush1.msra.mxu0 0.0
    %262 = vmatprep.subr.mxu0 0.0
    %263 = vmatpush1.msra.mxu0 0.0
    %264 = vmatprep.subr.mxu0 0.0
    %265 = vmatpush1.msra.mxu0 0.0
    %266 = vmatprep.subr.mxu0 0.0
    %267 = vmatpush1.msra.mxu0 0.0
    %268 = vmatprep.subr.mxu0 0.0
    %269 = vmatpush1.msra.mxu0 0.0
    %270 = vmatprep.subr.mxu0 0.0
    %271 = vmatpush1.msra.mxu0 0.0
    %272 = vmatprep.mubr.f32.mxu0 0.0
    %273 = vmatmul.mubr.f32.gmra.mrb[0].mxu0 %v206
    %v274 = vpop.f32.mrb[0].mxu0
    %v275 = vadd.f32 0.0, %v274
    %v276 = vpop.f32.mrb[0].mxu0
    %277 = vdwg.mxu0
    %v278 = vrcp.pop %v204
    %v279 = vmul.f32 %v275, %v278
    %vm280 = vcmask 261120
    %v282 = vsel %vm280, %v279, 0
    %284 = vmatprep.subr.mxu0 0.0
    %285 = vmatpush1.xpose.msra.mxu0 %v282
    %286 = vmatprep.subr.mxu0 0.0
    %287 = vmatpush1.xpose.msra.mxu0 0.0
    %288 = vmatprep.subr.mxu0 0.0
    %289 = vmatpush1.xpose.msra.mxu0 0.0
    %290 = vmatprep.subr.mxu0 0.0
    %291 = vmatpush1.xpose.msra.mxu0 0.0
    %292 = vmatprep.subr.mxu0 0.0
    %293 = vmatpush1.xpose.msra.mxu0 0.0
    %294 = vmatprep.subr.mxu0 0.0
    %295 = vmatpush1.xpose.msra.mxu0 0.0
    %296 = vmatprep.subr.mxu0 0.0
    %297 = vmatpush1.xpose.msra.mxu0 0.0
    %298 = vmatprep.subr.mxu0 0.0
    %299 = vmatpush1.xpose.msra.mxu0 0.0
    %300 = vmatprep.subr.mxu0 0.0
    %301 = vmatpush1.xpose.msra.mxu0 0.0
    %302 = vmatprep.subr.mxu0 0.0
    %303 = vmatpush1.xpose.msra.mxu0 0.0
    %304 = vmatprep.subr.mxu0 0.0
    %305 = vmatpush1.xpose.msra.mxu0 0.0
    %306 = vmatprep.subr.mxu0 0.0
    %307 = vmatpush1.xpose.msra.mxu0 0.0
    %308 = vmatprep.subr.mxu0 0.0
    %309 = vmatpush1.xpose.msra.mxu0 0.0
    %310 = vmatprep.subr.mxu0 0.0
    %311 = vmatpush1.xpose.msra.mxu0 0.0
    %312 = vmatprep.subr.mxu0 0.0
    %313 = vmatpush1.xpose.msra.mxu0 0.0
    %314 = vmatprep.subr.mxu0 0.0
    %315 = vmatpush1.xpose.msra.mxu0 0.0
    %316 = vmatprep.subr.mxu0 0.0
    %317 = vmatpush1.xpose.msra.mxu0 0.0
    %318 = vmatprep.subr.mxu0 0.0
    %319 = vmatpush1.xpose.msra.mxu0 0.0
    %320 = vmatprep.subr.mxu0 0.0
    %321 = vmatpush1.xpose.msra.mxu0 0.0
    %322 = vmatprep.subr.mxu0 0.0
    %323 = vmatpush1.xpose.msra.mxu0 0.0
    %324 = vmatprep.subr.mxu0 0.0
    %325 = vmatpush1.xpose.msra.mxu0 0.0
    %326 = vmatprep.subr.mxu0 0.0
    %327 = vmatpush1.xpose.msra.mxu0 0.0
    %328 = vmatprep.subr.mxu0 0.0
    %329 = vmatpush1.xpose.msra.mxu0 0.0
    %330 = vmatprep.subr.mxu0 0.0
    %331 = vmatpush1.xpose.msra.mxu0 0.0
    %332 = vmatprep.subr.mxu0 0.0
    %333 = vmatpush1.xpose.msra.mxu0 0.0
    %334 = vmatprep.subr.mxu0 0.0
    %335 = vmatpush1.xpose.msra.mxu0 0.0
    %336 = vmatprep.subr.mxu0 0.0
    %337 = vmatpush1.xpose.msra.mxu0 0.0
    %338 = vmatprep.subr.mxu0 0.0
    %339 = vmatpush1.xpose.msra.mxu0 0.0
    %340 = vmatprep.subr.mxu0 0.0
    %341 = vmatpush1.xpose.msra.mxu0 0.0
    %342 = vmatprep.subr.mxu0 0.0
    %343 = vmatpush1.xpose.msra.mxu0 0.0
    %344 = vmatprep.subr.mxu0 0.0
    %345 = vmatpush1.xpose.msra.mxu0 0.0
    %346 = vmatprep.subr.mxu0 0.0
    %347 = vmatpush1.xpose.msra.mxu0 0.0
    %348 = vmatprep.mubr.f32.mxu0 0.0
    %349 = vmatmul.mubr.f32.gmra.mrb[0].mxu0 %v282
    %v350 = vpop.f32.mrb[0].mxu0
    %v351 = vadd.f32 0.0, %v350
    %v352 = vpop.f32.mrb[0].mxu0
    %353 = vdwg.mxu0
    %v354 = vxor.u32 %v351, 2147483648
    %v355 = vmul.f32 %v354, 1.442695
    %v356 = vpow.pop %v355
    %v357 = vadd.f32 %v356, 1.0
    %v358 = vrcp.pop %v357
    %v359 = vmul.f32 1.0, %v358
    %v360 = vld [vmem:[%s6] sm:$0xff]
    %v361 = vld [vmem:[%s6 + $0x8] sm:$0xff]
    %v362 = vld [vmem:[%s6 + $0x10] sm:$0xff]
    %v363 = vld [vmem:[%s6 + $0x18] sm:$0xff]
    %v364 = vld [vmem:[%s7] sm:$0x1]
    %vm365 = vcmask 64512
    %v366 = vsel %vm365, %v359, 0.0
    %367 = vadd.xlane.f32.xlu0 %v366
    %v368 = vpop.xlane.xlu0 %367
    %v369 = vadd.f32 %v368, 2.0
    %v370 = vrsqrt.pop %v369
    %371 = vmatprep.subr.mxu0 0.0
    %372 = vmatpush1.msra.mxu0 %v360
    %373 = vmatprep.subr.mxu0 0.0
    %374 = vmatpush1.msra.mxu0 %v361
    %375 = vmatprep.subr.mxu0 0.0
    %376 = vmatpush1.msra.mxu0 %v362
    %377 = vmatprep.subr.mxu0 0.0
    %378 = vmatpush1.msra.mxu0 %v363
    %379 = vmatprep.subr.mxu0 0.0
    %380 = vmatpush1.msra.mxu0 0.0
    %381 = vmatprep.subr.mxu0 0.0
    %382 = vmatpush1.msra.mxu0 0.0
    %383 = vmatprep.subr.mxu0 0.0
    %384 = vmatpush1.msra.mxu0 0.0
    %385 = vmatprep.subr.mxu0 0.0
    %386 = vmatpush1.msra.mxu0 0.0
    %387 = vmatprep.subr.mxu0 0.0
    %388 = vmatpush1.msra.mxu0 0.0
    %389 = vmatprep.subr.mxu0 0.0
    %390 = vmatpush1.msra.mxu0 0.0
    %391 = vmatprep.subr.mxu0 0.0
    %392 = vmatpush1.msra.mxu0 0.0
    %393 = vmatprep.subr.mxu0 0.0
    %394 = vmatpush1.msra.mxu0 0.0
    %395 = vmatprep.subr.mxu0 0.0
    %396 = vmatpush1.msra.mxu0 0.0
    %397 = vmatprep.subr.mxu0 0.0
    %398 = vmatpush1.msra.mxu0 0.0
    %399 = vmatprep.subr.mxu0 0.0
    %400 = vmatpush1.msra.mxu0 0.0
    %401 = vmatprep.subr.mxu0 0.0
    %402 = vmatpush1.msra.mxu0 0.0
    %403 = vmatprep.subr.mxu0 0.0
    %404 = vmatpush1.msra.mxu0 0.0
    %405 = vmatprep.subr.mxu0 0.0
    %406 = vmatpush1.msra.mxu0 0.0
    %407 = vmatprep.subr.mxu0 0.0
    %408 = vmatpush1.msra.mxu0 0.0
    %409 = vmatprep.subr.mxu0 0.0
    %410 = vmatpush1.msra.mxu0 0.0
    %411 = vmatprep.subr.mxu0 0.0
    %412 = vmatpush1.msra.mxu0 0.0
    %413 = vmatprep.subr.mxu0 0.0
    %414 = vmatpush1.msra.mxu0 0.0
    %415 = vmatprep.subr.mxu0 0.0
    %416 = vmatpush1.msra.mxu0 0.0
    %417 = vmatprep.subr.mxu0 0.0
    %418 = vmatpush1.msra.mxu0 0.0
    %419 = vmatprep.subr.mxu0 0.0
    %420 = vmatpush1.msra.mxu0 0.0
    %421 = vmatprep.subr.mxu0 0.0
    %422 = vmatpush1.msra.mxu0 0.0
    %423 = vmatprep.subr.mxu0 0.0
    %424 = vmatpush1.msra.mxu0 0.0
    %425 = vmatprep.subr.mxu0 0.0
    %426 = vmatpush1.msra.mxu0 0.0
    %427 = vmatprep.subr.mxu0 0.0
    %428 = vmatpush1.msra.mxu0 0.0
    %429 = vmatprep.subr.mxu0 0.0
    %430 = vmatpush1.msra.mxu0 0.0
    %431 = vmatprep.subr.mxu0 0.0
    %432 = vmatpush1.msra.mxu0 0.0
    %433 = vmatprep.subr.mxu0 0.0
    %434 = vmatpush1.msra.mxu0 0.0
    %435 = vmatprep.mubr.f32.mxu0 0.0
    %436 = vmatmul.mubr.f32.gmra.mrb[0].mxu0 %v282
    %v437 = vpop.f32.mrb[0].mxu0
    %v438 = vadd.f32 0.0, %v437
    %v439 = vpop.f32.mrb[0].mxu0
    %440 = vdwg.mxu0
    %v441 = vmul.f32 %v370, %v438
    %v442 = vmul.f32 %v441, 2.0
    %v444 = vsel %vm365, %v359, 0
    %446 = vmatprep.subr.mxu0 0.0
    %447 = vmatpush1.msra.mxu0 %v441
    %448 = vmatprep.subr.mxu0 0.0
    %449 = vmatpush1.msra.mxu0 0.0
    %450 = vmatprep.subr.mxu0 0.0
    %451 = vmatpush1.msra.mxu0 0.0
    %452 = vmatprep.subr.mxu0 0.0
    %453 = vmatpush1.msra.mxu0 0.0
    %454 = vmatprep.subr.mxu0 0.0
    %455 = vmatpush1.msra.mxu0 0.0
    %456 = vmatprep.subr.mxu0 0.0
    %457 = vmatpush1.msra.mxu0 0.0
    %458 = vmatprep.subr.mxu0 0.0
    %459 = vmatpush1.msra.mxu0 0.0
    %460 = vmatprep.subr.mxu0 0.0
    %461 = vmatpush1.msra.mxu0 0.0
    %462 = vmatprep.subr.mxu0 0.0
    %463 = vmatpush1.msra.mxu0 0.0
    %464 = vmatprep.subr.mxu0 0.0
    %465 = vmatpush1.msra.mxu0 0.0
    %466 = vmatprep.subr.mxu0 0.0
    %467 = vmatpush1.msra.mxu0 0.0
    %468 = vmatprep.subr.mxu0 0.0
    %469 = vmatpush1.msra.mxu0 0.0
    %470 = vmatprep.subr.mxu0 0.0
    %471 = vmatpush1.msra.mxu0 0.0
    %472 = vmatprep.subr.mxu0 0.0
    %473 = vmatpush1.msra.mxu0 0.0
    %474 = vmatprep.subr.mxu0 0.0
    %475 = vmatpush1.msra.mxu0 0.0
    %476 = vmatprep.subr.mxu0 0.0
    %477 = vmatpush1.msra.mxu0 0.0
    %478 = vmatprep.subr.mxu0 0.0
    %479 = vmatpush1.msra.mxu0 0.0
    %480 = vmatprep.subr.mxu0 0.0
    %481 = vmatpush1.msra.mxu0 0.0
    %482 = vmatprep.subr.mxu0 0.0
    %483 = vmatpush1.msra.mxu0 0.0
    %484 = vmatprep.subr.mxu0 0.0
    %485 = vmatpush1.msra.mxu0 0.0
    %486 = vmatprep.subr.mxu0 0.0
    %487 = vmatpush1.msra.mxu0 0.0
    %488 = vmatprep.subr.mxu0 0.0
    %489 = vmatpush1.msra.mxu0 0.0
    %490 = vmatprep.subr.mxu0 0.0
    %491 = vmatpush1.msra.mxu0 0.0
    %492 = vmatprep.subr.mxu0 0.0
    %493 = vmatpush1.msra.mxu0 0.0
    %494 = vmatprep.subr.mxu0 0.0
    %495 = vmatpush1.msra.mxu0 0.0
    %496 = vmatprep.subr.mxu0 0.0
    %497 = vmatpush1.msra.mxu0 0.0
    %498 = vmatprep.subr.mxu0 0.0
    %499 = vmatpush1.msra.mxu0 0.0
    %500 = vmatprep.subr.mxu0 0.0
    %501 = vmatpush1.msra.mxu0 0.0
    %502 = vmatprep.subr.mxu0 0.0
    %503 = vmatpush1.msra.mxu0 0.0
    %504 = vmatprep.subr.mxu0 0.0
    %505 = vmatpush1.msra.mxu0 0.0
    %506 = vmatprep.subr.mxu0 0.0
    %507 = vmatpush1.msra.mxu0 0.0
    %508 = vmatprep.subr.mxu0 0.0
    %509 = vmatpush1.msra.mxu0 0.0
    %510 = vmatprep.mubr.f32.mxu0 0.0
    %511 = vmatmul.mubr.f32.gmra.mrb[0].mxu0 %v444
    %v512 = vpop.f32.mrb[0].mxu0
    %v513 = vadd.f32 %v442, %v512
    %v514 = vpop.f32.mrb[0].mxu0
    %515 = vdwg.mxu0
    %v516 = vmul.f32 %v370, %v513
    %v518 = vlaneseq
    %v519 = vshrl.u32 %v518, 7
    %v520 = vsub.s32 0, %v519
    %v521 = vrot.slane %v364, %v520
    %v523 = vadd.f32 %v516, %v521
    %v524 = vsel %vm365, %v87, 0.0
    %v525 = vsel %vm365, %v88, 0.0
    %v526 = vadd.f32 %v524, %v525
    %v527 = vrot.slane %v526, 4
    %v528 = vadd.f32 %v526, %v527
    %v529 = vrot.slane %v528, 2
    %v530 = vadd.f32 %v528, %v529
    %v531 = vrot.slane %v530, 1
    %v532 = vadd.f32 %v530, %v531
    %v533 = vsub.f32 %v532, 1.0
    %v534 = vmax.f32 %v533, 0.0
    %v535 = vadd.f32 %v534, 1.0
    %v536 = vrcp.pop %v535
    %v537 = vmul.f32 %v87, %v536
    %v538 = vmul.f32 %v88, %v536
    %v539 = vsel %vm365, %v537, 0.0
    %540 = vadd.xlane.f32.xlu0 %v539
    %v541 = vpop.xlane.xlu0 %540
    %v542 = vsel %vm365, %v538, 0.0
    %543 = vadd.xlane.f32.xlu0 %v542
    %v544 = vpop.xlane.xlu0 %543
    %v545 = vsub.f32 %v541, 1.0
    %v546 = vsub.f32 %v544, 1.0
    %v547 = vmax.f32 %v545, 0.0
    %v548 = vmax.f32 %v546, 0.0
    %v549 = vadd.f32 %v547, 1.0
    %v550 = vadd.f32 %v548, 1.0
    %v552 = vsel %vm365, %v87, 0
    %v555 = vsel %vm365, %v88, 0
    %557 = vmatprep.subr.mxu0 0.0
    %558 = vmatpush1.msra.mxu0 %v523
    %559 = vmatprep.subr.mxu0 0.0
    %560 = vmatpush1.msra.mxu0 0.0
    %561 = vmatprep.subr.mxu0 0.0
    %562 = vmatpush1.msra.mxu0 0.0
    %563 = vmatprep.subr.mxu0 0.0
    %564 = vmatpush1.msra.mxu0 0.0
    %565 = vmatprep.subr.mxu0 0.0
    %566 = vmatpush1.msra.mxu0 0.0
    %567 = vmatprep.subr.mxu0 0.0
    %568 = vmatpush1.msra.mxu0 0.0
    %569 = vmatprep.subr.mxu0 0.0
    %570 = vmatpush1.msra.mxu0 0.0
    %571 = vmatprep.subr.mxu0 0.0
    %572 = vmatpush1.msra.mxu0 0.0
    %573 = vmatprep.subr.mxu0 0.0
    %574 = vmatpush1.msra.mxu0 0.0
    %575 = vmatprep.subr.mxu0 0.0
    %576 = vmatpush1.msra.mxu0 0.0
    %577 = vmatprep.subr.mxu0 0.0
    %578 = vmatpush1.msra.mxu0 0.0
    %579 = vmatprep.subr.mxu0 0.0
    %580 = vmatpush1.msra.mxu0 0.0
    %581 = vmatprep.subr.mxu0 0.0
    %582 = vmatpush1.msra.mxu0 0.0
    %583 = vmatprep.subr.mxu0 0.0
    %584 = vmatpush1.msra.mxu0 0.0
    %585 = vmatprep.subr.mxu0 0.0
    %586 = vmatpush1.msra.mxu0 0.0
    %587 = vmatprep.subr.mxu0 0.0
    %588 = vmatpush1.msra.mxu0 0.0
    %589 = vmatprep.subr.mxu0 0.0
    %590 = vmatpush1.msra.mxu0 0.0
    %591 = vmatprep.subr.mxu0 0.0
    %592 = vmatpush1.msra.mxu0 0.0
    %593 = vmatprep.subr.mxu0 0.0
    %594 = vmatpush1.msra.mxu0 0.0
    %595 = vmatprep.subr.mxu0 0.0
    %596 = vmatpush1.msra.mxu0 0.0
    %597 = vmatprep.subr.mxu0 0.0
    %598 = vmatpush1.msra.mxu0 0.0
    %599 = vmatprep.subr.mxu0 0.0
    %600 = vmatpush1.msra.mxu0 0.0
    %601 = vmatprep.subr.mxu0 0.0
    %602 = vmatpush1.msra.mxu0 0.0
    %603 = vmatprep.subr.mxu0 0.0
    %604 = vmatpush1.msra.mxu0 0.0
    %605 = vmatprep.subr.mxu0 0.0
    %606 = vmatpush1.msra.mxu0 0.0
    %607 = vmatprep.subr.mxu0 0.0
    %608 = vmatpush1.msra.mxu0 0.0
    %609 = vmatprep.subr.mxu0 0.0
    %610 = vmatpush1.msra.mxu0 0.0
    %611 = vmatprep.subr.mxu0 0.0
    %612 = vmatpush1.msra.mxu0 0.0
    %613 = vmatprep.subr.mxu0 0.0
    %614 = vmatpush1.msra.mxu0 0.0
    %615 = vmatprep.subr.mxu0 0.0
    %616 = vmatpush1.msra.mxu0 0.0
    %617 = vmatprep.subr.mxu0 0.0
    %618 = vmatpush1.msra.mxu0 0.0
    %619 = vmatprep.subr.mxu0 0.0
    %620 = vmatpush1.msra.mxu0 0.0
    %621 = vmatprep.mubr.f32.mxu0 0.0
    %622 = vmatmul.mubr.f32.gmra.mrb[0].mxu0 %v552
    %v623 = vpop.f32.mrb[0].mxu0
    %v624 = vadd.f32 0.0, %v623
    %v625 = vpop.f32.mrb[0].mxu0
    %626 = vmatprep.mubr.f32.mxu0 0.0
    %627 = vmatmul.mubr.f32.gmra.mrb[0].mxu0 %v555
    %v628 = vpop.f32.mrb[0].mxu0
    %v629 = vadd.f32 0.0, %v628
    %v630 = vpop.f32.mrb[0].mxu0
    %631 = vdwg.mxu0
    %v632 = vrcp.pop %v549
    %v633 = vmul.f32 %v624, %v632
    %v634 = vrcp.pop %v550
    %v635 = vmul.f32 %v629, %v634
    %v636 = vld [vmem:[%s10] sm:$0x3]
    %v637 = vlaneseq
    %v638 = vshrl.u32 %v637, 7
    %v639 = vsub.s32 0, %v638
    %v640 = vrot.slane %v636, %v639
    %v641 = vmul.f32 %v195, %v640
    %v642 = vmul.f32 %v197, %v640
    %v643 = vsel %vm280, %v641, 0.0
    %644 = vadd.xlane.f32.xlu0 %v643
    %v645 = vpop.xlane.xlu0 %644
    %v646 = vsel %vm280, %v642, 0.0
    %647 = vadd.xlane.f32.xlu0 %v646
    %v648 = vpop.xlane.xlu0 %647
    %v649 = vlaneseq
    %v650 = vshrl.u32 %v649, 7
    %v651 = vsub.s32 1, %v650
    %v652 = vrot.slane %v636, %v651
    %v653 = vmul.f32 %v633, %v652
    %v654 = vmul.f32 %v635, %v652
    %v655 = vsel %vm280, %v653, 0.0
    %656 = vadd.xlane.f32.xlu0 %v655
    %v657 = vpop.xlane.xlu0 %656
    %v658 = vsel %vm280, %v654, 0.0
    %659 = vadd.xlane.f32.xlu0 %v658
    %v660 = vpop.xlane.xlu0 %659
    %v661 = vadd.f32 %v645, %v657
    %v662 = vadd.f32 %v648, %v660
    %v663 = vld [vmem:[#allocation2] sm:$0x1]
    %v665 = vlaneseq
    %v666 = vshrl.u32 %v665, 7
    %v667 = vsub.s32 0, %v666
    %v668 = vrot.slane %v663, %v667
    %v670 = vadd.f32 %v661, %v668
    %v671 = vadd.f32 %v662, %v668
    %v672 = vxor.u32 %v670, 2147483648
    %v673 = vxor.u32 %v671, 2147483648
    %v674 = vmul.f32 %v672, 1.442695
    %v675 = vpow.pop %v674
    %v676 = vmul.f32 %v673, 1.442695
    %v677 = vpow.pop %v676
    %v678 = vadd.f32 %v675, 1.0
    %v679 = vadd.f32 %v677, 1.0
    %v680 = vrcp.pop %v678
    %v681 = vmul.f32 1.0, %v680
    %v682 = vrcp.pop %v679
    %v683 = vmul.f32 1.0, %v682
    %685 = vset.pattern.permute.xlu0 0
    %686 = vperm.xlu0 %685, %v681
    %v687 = vpop.permute.xlu0 %686
    %690 = vset.pattern.permute.xlu0 0
    %691 = vperm.xlu0 %690, %v683
    %v692 = vpop.permute.xlu0 %691
    %694 = vst [vmem:[#allocation7] sm:$0xff] %v687
    %695 = vst [vmem:[#allocation7 + $0x8] sm:$0xff] %v692
    %v696 = vmul.f32 %v633, 0.15
    %v697 = vmul.f32 %v635, 0.15
    %v698 = vadd.f32 %v195, %v696
    %v699 = vadd.f32 %v197, %v697
    %v700 = vlaneseq
    %v701 = vshrl.u32 %v700, 7
    %v702 = vadd.s32 %v701, 8
    %v703 = vlaneseq
    %v704 = vand.u32 %v703, 127
    %vm705 = vcmp.eq.s32.totalorder %v701, %v704
    %vm706 = vcmp.eq.s32.totalorder %v702, %v704
    %v707 = vsub.f32 %v98, 10000.0
    %v708 = vsub.f32 %v99, 10000.0
    %v709 = vsel %vm705, %v707, %v98
    %v710 = vsel %vm706, %v708, %v99
    %v711 = vmax.f32 %v709, 0.0
    %v712 = vmax.f32 %v710, 0.0
    %v713 = vld [vmem:[%s8] sm:$0xff]
    %v714 = vld [vmem:[%s8 + $0x8] sm:$0xff]
    %v715 = vld [vmem:[%s8 + $0x10] sm:$0xff]
    %v716 = vld [vmem:[%s8 + $0x18] sm:$0xff]
    %v717 = vld [vmem:[%s9] sm:$0x1]
    %v718 = vsel %vm198, %v711, 0.0
    %719 = vadd.xlane.f32.xlu0 %v718
    %v720 = vpop.xlane.xlu0 %719
    %v721 = vsel %vm198, %v712, 0.0
    %722 = vadd.xlane.f32.xlu0 %v721
    %v723 = vpop.xlane.xlu0 %722
    %v724 = vadd.f32 %v720, 2.0
    %v725 = vadd.f32 %v723, 2.0
    %v726 = vrsqrt.pop %v724
    %v727 = vrsqrt.pop %v725
    %v729 = vsel %vm280, %v698, 0
    %v732 = vsel %vm280, %v699, 0
    %734 = vmatprep.subr.mxu0 0.0
    %735 = vmatpush1.msra.mxu0 %v713
    %736 = vmatprep.subr.mxu0 0.0
    %737 = vmatpush1.msra.mxu0 %v714
    %738 = vmatprep.subr.mxu0 0.0
    %739 = vmatpush1.msra.mxu0 %v715
    %740 = vmatprep.subr.mxu0 0.0
    %741 = vmatpush1.msra.mxu0 %v716
    %742 = vmatprep.subr.mxu0 0.0
    %743 = vmatpush1.msra.mxu0 0.0
    %744 = vmatprep.subr.mxu0 0.0
    %745 = vmatpush1.msra.mxu0 0.0
    %746 = vmatprep.subr.mxu0 0.0
    %747 = vmatpush1.msra.mxu0 0.0
    %748 = vmatprep.subr.mxu0 0.0
    %749 = vmatpush1.msra.mxu0 0.0
    %750 = vmatprep.subr.mxu0 0.0
    %751 = vmatpush1.msra.mxu0 0.0
    %752 = vmatprep.subr.mxu0 0.0
    %753 = vmatpush1.msra.mxu0 0.0
    %754 = vmatprep.subr.mxu0 0.0
    %755 = vmatpush1.msra.mxu0 0.0
    %756 = vmatprep.subr.mxu0 0.0
    %757 = vmatpush1.msra.mxu0 0.0
    %758 = vmatprep.subr.mxu0 0.0
    %759 = vmatpush1.msra.mxu0 0.0
    %760 = vmatprep.subr.mxu0 0.0
    %761 = vmatpush1.msra.mxu0 0.0
    %762 = vmatprep.subr.mxu0 0.0
    %763 = vmatpush1.msra.mxu0 0.0
    %764 = vmatprep.subr.mxu0 0.0
    %765 = vmatpush1.msra.mxu0 0.0
    %766 = vmatprep.subr.mxu0 0.0
    %767 = vmatpush1.msra.mxu0 0.0
    %768 = vmatprep.subr.mxu0 0.0
    %769 = vmatpush1.msra.mxu0 0.0
    %770 = vmatprep.subr.mxu0 0.0
    %771 = vmatpush1.msra.mxu0 0.0
    %772 = vmatprep.subr.mxu0 0.0
    %773 = vmatpush1.msra.mxu0 0.0
    %774 = vmatprep.subr.mxu0 0.0
    %775 = vmatpush1.msra.mxu0 0.0
    %776 = vmatprep.subr.mxu0 0.0
    %777 = vmatpush1.msra.mxu0 0.0
    %778 = vmatprep.subr.mxu0 0.0
    %779 = vmatpush1.msra.mxu0 0.0
    %780 = vmatprep.subr.mxu0 0.0
    %781 = vmatpush1.msra.mxu0 0.0
    %782 = vmatprep.subr.mxu0 0.0
    %783 = vmatpush1.msra.mxu0 0.0
    %784 = vmatprep.subr.mxu0 0.0
    %785 = vmatpush1.msra.mxu0 0.0
    %786 = vmatprep.subr.mxu0 0.0
    %787 = vmatpush1.msra.mxu0 0.0
    %788 = vmatprep.subr.mxu0 0.0
    %789 = vmatpush1.msra.mxu0 0.0
    %790 = vmatprep.subr.mxu0 0.0
    %791 = vmatpush1.msra.mxu0 0.0
    %792 = vmatprep.subr.mxu0 0.0
    %793 = vmatpush1.msra.mxu0 0.0
    %794 = vmatprep.subr.mxu0 0.0
    %795 = vmatpush1.msra.mxu0 0.0
    %796 = vmatprep.subr.mxu0 0.0
    %797 = vmatpush1.msra.mxu0 0.0
    %798 = vmatprep.mubr.f32.mxu0 0.0
    %799 = vmatmul.mubr.f32.gmra.mrb[0].mxu0 %v729
    %v800 = vpop.f32.mrb[0].mxu0
    %v801 = vadd.f32 0.0, %v800
    %v802 = vpop.f32.mrb[0].mxu0
    %803 = vmatprep.mubr.f32.mxu0 0.0
    %804 = vmatmul.mubr.f32.gmra.mrb[0].mxu0 %v732
    %v805 = vpop.f32.mrb[0].mxu0
    %v806 = vadd.f32 0.0, %v805
    %v807 = vpop.f32.mrb[0].mxu0
    %808 = vdwg.mxu0
    %v809 = vmul.f32 %v726, %v801
    %v810 = vmul.f32 %v727, %v806
    %v811 = vmul.f32 %v809, 2.0
    %v812 = vmul.f32 %v810, 2.0
    %v814 = vsel %vm198, %v711, 0
    %v817 = vsel %vm198, %v712, 0
    %819 = vmatprep.subr.mxu0 0.0
    %820 = vmatpush1.msra.mxu0 %v809
    %821 = vmatprep.subr.mxu0 0.0
    %822 = vmatpush1.msra.mxu0 %v810
    %823 = vmatprep.subr.mxu0 0.0
    %824 = vmatpush1.msra.mxu0 0.0
    %825 = vmatprep.subr.mxu0 0.0
    %826 = vmatpush1.msra.mxu0 0.0
    %827 = vmatprep.subr.mxu0 0.0
    %828 = vmatpush1.msra.mxu0 0.0
    %829 = vmatprep.subr.mxu0 0.0
    %830 = vmatpush1.msra.mxu0 0.0
    %831 = vmatprep.subr.mxu0 0.0
    %832 = vmatpush1.msra.mxu0 0.0
    %833 = vmatprep.subr.mxu0 0.0
    %834 = vmatpush1.msra.mxu0 0.0
    %835 = vmatprep.subr.mxu0 0.0
    %836 = vmatpush1.msra.mxu0 0.0
    %837 = vmatprep.subr.mxu0 0.0
    %838 = vmatpush1.msra.mxu0 0.0
    %839 = vmatprep.subr.mxu0 0.0
    %840 = vmatpush1.msra.mxu0 0.0
    %841 = vmatprep.subr.mxu0 0.0
    %842 = vmatpush1.msra.mxu0 0.0
    %843 = vmatprep.subr.mxu0 0.0
    %844 = vmatpush1.msra.mxu0 0.0
    %845 = vmatprep.subr.mxu0 0.0
    %846 = vmatpush1.msra.mxu0 0.0
    %847 = vmatprep.subr.mxu0 0.0
    %848 = vmatpush1.msra.mxu0 0.0
    %849 = vmatprep.subr.mxu0 0.0
    %850 = vmatpush1.msra.mxu0 0.0
    %851 = vmatprep.subr.mxu0 0.0
    %852 = vmatpush1.msra.mxu0 0.0
    %853 = vmatprep.subr.mxu0 0.0
    %854 = vmatpush1.msra.mxu0 0.0
    %855 = vmatprep.subr.mxu0 0.0
    %856 = vmatpush1.msra.mxu0 0.0
    %857 = vmatprep.subr.mxu0 0.0
    %858 = vmatpush1.msra.mxu0 0.0
    %859 = vmatprep.subr.mxu0 0.0
    %860 = vmatpush1.msra.mxu0 0.0
    %861 = vmatprep.subr.mxu0 0.0
    %862 = vmatpush1.msra.mxu0 0.0
    %863 = vmatprep.subr.mxu0 0.0
    %864 = vmatpush1.msra.mxu0 0.0
    %865 = vmatprep.subr.mxu0 0.0
    %866 = vmatpush1.msra.mxu0 0.0
    %867 = vmatprep.subr.mxu0 0.0
    %868 = vmatpush1.msra.mxu0 0.0
    %869 = vmatprep.subr.mxu0 0.0
    %870 = vmatpush1.msra.mxu0 0.0
    %871 = vmatprep.subr.mxu0 0.0
    %872 = vmatpush1.msra.mxu0 0.0
    %873 = vmatprep.subr.mxu0 0.0
    %874 = vmatpush1.msra.mxu0 0.0
    %875 = vmatprep.subr.mxu0 0.0
    %876 = vmatpush1.msra.mxu0 0.0
    %877 = vmatprep.subr.mxu0 0.0
    %878 = vmatpush1.msra.mxu0 0.0
    %879 = vmatprep.subr.mxu0 0.0
    %880 = vmatpush1.msra.mxu0 0.0
    %881 = vmatprep.subr.mxu0 0.0
    %882 = vmatpush1.msra.mxu0 0.0
    %883 = vmatprep.mubr.f32.mxu0 0.0
    %884 = vmatmul.mubr.f32.gmra.mrb[0].mxu0 %v814
    %v885 = vpop.f32.mrb[0].mxu0
    %v886 = vadd.f32 %v811, %v885
    %v887 = vpop.f32.mrb[0].mxu0
    %888 = vmatprep.mubr.f32.mxu0 0.0
    %889 = vmatmul.mubr.f32.gmra.mrb[0].mxu0 %v817
    %v890 = vpop.f32.mrb[0].mxu0
    %v891 = vadd.f32 %v812, %v890
    %v892 = vpop.f32.mrb[0].mxu0
    %893 = vdwg.mxu0
    %v894 = vmul.f32 %v726, %v886
    %v895 = vmul.f32 %v727, %v891
    %v897 = vlaneseq
    %v898 = vshrl.u32 %v897, 7
    %v899 = vsub.s32 0, %v898
    %v900 = vrot.slane %v717, %v899
    %v902 = vadd.f32 %v894, %v900
    %v903 = vadd.f32 %v895, %v900
    %v905 = vsel %vm198, %v77, 0
    %v908 = vsel %vm198, %v78, 0
    %v911 = vsel %vm198, %v79, 0
    %v914 = vsel %vm198, %v80, 0
    %v917 = vsel %vm198, %v81, 0
    %v920 = vsel %vm198, %v82, 0
    %v923 = vsel %vm198, %v83, 0
    %v926 = vsel %vm198, %v84, 0
    %928 = vmatprep.subr.mxu0 0.0
    %929 = vmatpush1.msra.mxu0 %v902
    %930 = vmatprep.subr.mxu0 0.0
    %931 = vmatpush1.msra.mxu0 %v903
    %932 = vmatprep.subr.mxu0 0.0
    %933 = vmatpush1.msra.mxu0 0.0
    %934 = vmatprep.subr.mxu0 0.0
    %935 = vmatpush1.msra.mxu0 0.0
    %936 = vmatprep.subr.mxu0 0.0
    %937 = vmatpush1.msra.mxu0 0.0
    %938 = vmatprep.subr.mxu0 0.0
    %939 = vmatpush1.msra.mxu0 0.0
    %940 = vmatprep.subr.mxu0 0.0
    %941 = vmatpush1.msra.mxu0 0.0
    %942 = vmatprep.subr.mxu0 0.0
    %943 = vmatpush1.msra.mxu0 0.0
    %944 = vmatprep.subr.mxu0 0.0
    %945 = vmatpush1.msra.mxu0 0.0
    %946 = vmatprep.subr.mxu0 0.0
    %947 = vmatpush1.msra.mxu0 0.0
    %948 = vmatprep.subr.mxu0 0.0
    %949 = vmatpush1.msra.mxu0 0.0
    %950 = vmatprep.subr.mxu0 0.0
    %951 = vmatpush1.msra.mxu0 0.0
    %952 = vmatprep.subr.mxu0 0.0
    %953 = vmatpush1.msra.mxu0 0.0
    %954 = vmatprep.subr.mxu0 0.0
    %955 = vmatpush1.msra.mxu0 0.0
    %956 = vmatprep.subr.mxu0 0.0
    %957 = vmatpush1.msra.mxu0 0.0
    %958 = vmatprep.subr.mxu0 0.0
    %959 = vmatpush1.msra.mxu0 0.0
    %960 = vmatprep.subr.mxu0 0.0
    %961 = vmatpush1.msra.mxu0 0.0
    %962 = vmatprep.subr.mxu0 0.0
    %963 = vmatpush1.msra.mxu0 0.0
    %964 = vmatprep.subr.mxu0 0.0
    %965 = vmatpush1.msra.mxu0 0.0
    %966 = vmatprep.subr.mxu0 0.0
    %967 = vmatpush1.msra.mxu0 0.0
    %968 = vmatprep.subr.mxu0 0.0
    %969 = vmatpush1.msra.mxu0 0.0
    %970 = vmatprep.subr.mxu0 0.0
    %971 = vmatpush1.msra.mxu0 0.0
    %972 = vmatprep.subr.mxu0 0.0
    %973 = vmatpush1.msra.mxu0 0.0
    %974 = vmatprep.subr.mxu0 0.0
    %975 = vmatpush1.msra.mxu0 0.0
    %976 = vmatprep.subr.mxu0 0.0
    %977 = vmatpush1.msra.mxu0 0.0
    %978 = vmatprep.subr.mxu0 0.0
    %979 = vmatpush1.msra.mxu0 0.0
    %980 = vmatprep.subr.mxu0 0.0
    %981 = vmatpush1.msra.mxu0 0.0
    %982 = vmatprep.subr.mxu0 0.0
    %983 = vmatpush1.msra.mxu0 0.0
    %984 = vmatprep.subr.mxu0 0.0
    %985 = vmatpush1.msra.mxu0 0.0
    %986 = vmatprep.subr.mxu0 0.0
    %987 = vmatpush1.msra.mxu0 0.0
    %988 = vmatprep.subr.mxu0 0.0
    %989 = vmatpush1.msra.mxu0 0.0
    %990 = vmatprep.subr.mxu0 0.0
    %991 = vmatpush1.msra.mxu0 0.0
    %992 = vmatprep.mubr.f32.mxu0 0.0
    %993 = vmatmul.mubr.f32.gmra.mrb[0].mxu0 %v905
    %v994 = vpop.f32.mrb[0].mxu0
    %v995 = vadd.f32 0.0, %v994
    %v996 = vpop.f32.mrb[0].mxu0
    %997 = vmatprep.mubr.f32.mxu0 0.0
    %998 = vmatmul.mubr.f32.gmra.mrb[0].mxu0 %v908
    %v999 = vpop.f32.mrb[0].mxu0
    %v1000 = vadd.f32 0.0, %v999
    %v1001 = vpop.f32.mrb[0].mxu0
    %1002 = vmatprep.mubr.f32.mxu0 0.0
    %1003 = vmatmul.mubr.f32.gmra.mrb[0].mxu0 %v911
    %v1004 = vpop.f32.mrb[0].mxu0
    %v1005 = vadd.f32 0.0, %v1004
    %v1006 = vpop.f32.mrb[0].mxu0
    %1007 = vmatprep.mubr.f32.mxu0 0.0
    %1008 = vmatmul.mubr.f32.gmra.mrb[0].mxu0 %v914
    %v1009 = vpop.f32.mrb[0].mxu0
    %v1010 = vadd.f32 0.0, %v1009
    %v1011 = vpop.f32.mrb[0].mxu0
    %1012 = vmatprep.mubr.f32.mxu0 0.0
    %1013 = vmatmul.mubr.f32.gmra.mrb[0].mxu0 %v917
    %v1014 = vpop.f32.mrb[0].mxu0
    %v1015 = vadd.f32 0.0, %v1014
    %v1016 = vpop.f32.mrb[0].mxu0
    %1017 = vmatprep.mubr.f32.mxu0 0.0
    %1018 = vmatmul.mubr.f32.gmra.mrb[0].mxu0 %v920
    %v1019 = vpop.f32.mrb[0].mxu0
    %v1020 = vadd.f32 0.0, %v1019
    %v1021 = vpop.f32.mrb[0].mxu0
    %1022 = vmatprep.mubr.f32.mxu0 0.0
    %1023 = vmatmul.mubr.f32.gmra.mrb[0].mxu0 %v923
    %v1024 = vpop.f32.mrb[0].mxu0
    %v1025 = vadd.f32 0.0, %v1024
    %v1026 = vpop.f32.mrb[0].mxu0
    %1027 = vmatprep.mubr.f32.mxu0 0.0
    %1028 = vmatmul.mubr.f32.gmra.mrb[0].mxu0 %v926
    %v1029 = vpop.f32.mrb[0].mxu0
    %v1030 = vadd.f32 0.0, %v1029
    %v1031 = vpop.f32.mrb[0].mxu0
    %1032 = vdwg.mxu0
    %v1033 = vld [vmem:[%s12] sm:$0x3]
    %v1034 = vlaneseq
    %v1035 = vshrl.u32 %v1034, 7
    %v1036 = vsub.s32 0, %v1035
    %v1037 = vrot.slane %v1033, %v1036
    %v1038 = vmul.f32 %v90, %v1037
    %v1039 = vmul.f32 %v91, %v1037
    %v1040 = vmul.f32 %v92, %v1037
    %v1041 = vmul.f32 %v93, %v1037
    %v1042 = vmul.f32 %v94, %v1037
    %v1043 = vmul.f32 %v95, %v1037
    %v1044 = vmul.f32 %v96, %v1037
    %v1045 = vmul.f32 %v97, %v1037
    %v1046 = vsel %vm280, %v1038, 0.0
    %1047 = vadd.xlane.f32.xlu0 %v1046
    %v1048 = vpop.xlane.xlu0 %1047
    %v1049 = vsel %vm280, %v1039, 0.0
    %1050 = vadd.xlane.f32.xlu0 %v1049
    %v1051 = vpop.xlane.xlu0 %1050
    %v1052 = vsel %vm280, %v1040, 0.0
    %1053 = vadd.xlane.f32.xlu0 %v1052
    %v1054 = vpop.xlane.xlu0 %1053
    %v1055 = vsel %vm280, %v1041, 0.0
    %1056 = vadd.xlane.f32.xlu0 %v1055
    %v1057 = vpop.xlane.xlu0 %1056
    %v1058 = vsel %vm280, %v1042, 0.0
    %1059 = vadd.xlane.f32.xlu0 %v1058
    %v1060 = vpop.xlane.xlu0 %1059
    %v1061 = vsel %vm280, %v1043, 0.0
    %1062 = vadd.xlane.f32.xlu0 %v1061
    %v1063 = vpop.xlane.xlu0 %1062
    %v1064 = vsel %vm280, %v1044, 0.0
    %1065 = vadd.xlane.f32.xlu0 %v1064
    %v1066 = vpop.xlane.xlu0 %1065
    %v1067 = vsel %vm280, %v1045, 0.0
    %1068 = vadd.xlane.f32.xlu0 %v1067
    %v1069 = vpop.xlane.xlu0 %1068
    %v1070 = vlaneseq
    %v1071 = vshrl.u32 %v1070, 7
    %v1072 = vsub.s32 1, %v1071
    %v1073 = vrot.slane %v1033, %v1072
    %v1074 = vmul.f32 %v995, %v1073
    %v1075 = vmul.f32 %v1000, %v1073
    %v1076 = vmul.f32 %v1005, %v1073
    %v1077 = vmul.f32 %v1010, %v1073
    %v1078 = vmul.f32 %v1015, %v1073
    %v1079 = vmul.f32 %v1020, %v1073
    %v1080 = vmul.f32 %v1025, %v1073
    %v1081 = vmul.f32 %v1030, %v1073
    %v1082 = vsel %vm280, %v1074, 0.0
    %1083 = vadd.xlane.f32.xlu0 %v1082
    %v1084 = vpop.xlane.xlu0 %1083
    %v1085 = vsel %vm280, %v1075, 0.0
    %1086 = vadd.xlane.f32.xlu0 %v1085
    %v1087 = vpop.xlane.xlu0 %1086
    %v1088 = vsel %vm280, %v1076, 0.0
    %1089 = vadd.xlane.f32.xlu0 %v1088
    %v1090 = vpop.xlane.xlu0 %1089
    %v1091 = vsel %vm280, %v1077, 0.0
    %1092 = vadd.xlane.f32.xlu0 %v1091
    %v1093 = vpop.xlane.xlu0 %1092
    %v1094 = vsel %vm280, %v1078, 0.0
    %1095 = vadd.xlane.f32.xlu0 %v1094
    %v1096 = vpop.xlane.xlu0 %1095
    %v1097 = vsel %vm280, %v1079, 0.0
    %1098 = vadd.xlane.f32.xlu0 %v1097
    %v1099 = vpop.xlane.xlu0 %1098
    %v1100 = vsel %vm280, %v1080, 0.0
    %1101 = vadd.xlane.f32.xlu0 %v1100
    %v1102 = vpop.xlane.xlu0 %1101
    %v1103 = vsel %vm280, %v1081, 0.0
    %1104 = vadd.xlane.f32.xlu0 %v1103
    %v1105 = vpop.xlane.xlu0 %1104
    %v1106 = vadd.f32 %v1048, %v1084
    %v1107 = vadd.f32 %v1051, %v1087
    %v1108 = vadd.f32 %v1054, %v1090
    %v1109 = vadd.f32 %v1057, %v1093
    %v1110 = vadd.f32 %v1060, %v1096
    %v1111 = vadd.f32 %v1063, %v1099
    %v1112 = vadd.f32 %v1066, %v1102
    %v1113 = vadd.f32 %v1069, %v1105
    %v1114 = vld [vmem:[#allocation3] sm:$0x1]
    %v1116 = vlaneseq
    %v1117 = vshrl.u32 %v1116, 7
    %v1118 = vsub.s32 0, %v1117
    %v1119 = vrot.slane %v1114, %v1118
    %v1121 = vadd.f32 %v1106, %v1119
    %v1122 = vadd.f32 %v1107, %v1119
    %v1123 = vadd.f32 %v1108, %v1119
    %v1124 = vadd.f32 %v1109, %v1119
    %v1125 = vadd.f32 %v1110, %v1119
    %v1126 = vadd.f32 %v1111, %v1119
    %v1127 = vadd.f32 %v1112, %v1119
    %v1128 = vadd.f32 %v1113, %v1119
    %v1129 = vxor.u32 %v1121, 2147483648
    %v1130 = vxor.u32 %v1122, 2147483648
    %v1131 = vxor.u32 %v1123, 2147483648
    %v1132 = vxor.u32 %v1124, 2147483648
    %v1133 = vxor.u32 %v1125, 2147483648
    %v1134 = vxor.u32 %v1126, 2147483648
    %v1135 = vxor.u32 %v1127, 2147483648
    %v1136 = vxor.u32 %v1128, 2147483648
    %v1137 = vmul.f32 %v1129, 1.442695
    %v1138 = vpow.pop %v1137
    %v1139 = vmul.f32 %v1130, 1.442695
    %v1140 = vpow.pop %v1139
    %v1141 = vmul.f32 %v1131, 1.442695
    %v1142 = vpow.pop %v1141
    %v1143 = vmul.f32 %v1132, 1.442695
    %v1144 = vpow.pop %v1143
    %v1145 = vmul.f32 %v1133, 1.442695
    %v1146 = vpow.pop %v1145
    %v1147 = vmul.f32 %v1134, 1.442695
    %v1148 = vpow.pop %v1147
    %v1149 = vmul.f32 %v1135, 1.442695
    %v1150 = vpow.pop %v1149
    %v1151 = vmul.f32 %v1136, 1.442695
    %v1152 = vpow.pop %v1151
    %v1153 = vadd.f32 %v1138, 1.0
    %v1154 = vadd.f32 %v1140, 1.0
    %v1155 = vadd.f32 %v1142, 1.0
    %v1156 = vadd.f32 %v1144, 1.0
    %v1157 = vadd.f32 %v1146, 1.0
    %v1158 = vadd.f32 %v1148, 1.0
    %v1159 = vadd.f32 %v1150, 1.0
    %v1160 = vadd.f32 %v1152, 1.0
    %v1161 = vrcp.pop %v1153
    %v1162 = vmul.f32 1.0, %v1161
    %v1163 = vrcp.pop %v1154
    %v1164 = vmul.f32 1.0, %v1163
    %v1165 = vrcp.pop %v1155
    %v1166 = vmul.f32 1.0, %v1165
    %v1167 = vrcp.pop %v1156
    %v1168 = vmul.f32 1.0, %v1167
    %v1169 = vrcp.pop %v1157
    %v1170 = vmul.f32 1.0, %v1169
    %v1171 = vrcp.pop %v1158
    %v1172 = vmul.f32 1.0, %v1171
    %v1173 = vrcp.pop %v1159
    %v1174 = vmul.f32 1.0, %v1173
    %v1175 = vrcp.pop %v1160
    %v1176 = vmul.f32 1.0, %v1175
    %1178 = vset.pattern.permute.xlu0 0
    %1179 = vperm.xlu0 %1178, %v1162
    %v1180 = vpop.permute.xlu0 %1179
    %1183 = vset.pattern.permute.xlu0 0
    %1184 = vperm.xlu0 %1183, %v1164
    %v1185 = vpop.permute.xlu0 %1184
    %1188 = vset.pattern.permute.xlu0 0
    %1189 = vperm.xlu0 %1188, %v1166
    %v1190 = vpop.permute.xlu0 %1189
    %1193 = vset.pattern.permute.xlu0 0
    %1194 = vperm.xlu0 %1193, %v1168
    %v1195 = vpop.permute.xlu0 %1194
    %1198 = vset.pattern.permute.xlu0 0
    %1199 = vperm.xlu0 %1198, %v1170
    %v1200 = vpop.permute.xlu0 %1199
    %1203 = vset.pattern.permute.xlu0 0
    %1204 = vperm.xlu0 %1203, %v1172
    %v1205 = vpop.permute.xlu0 %1204
    %1208 = vset.pattern.permute.xlu0 0
    %1209 = vperm.xlu0 %1208, %v1174
    %v1210 = vpop.permute.xlu0 %1209
    %1213 = vset.pattern.permute.xlu0 0
    %1214 = vperm.xlu0 %1213, %v1176
    %v1215 = vpop.permute.xlu0 %1214
    %1217 = vst [vmem:[#allocation8] sm:$0xff] %v1180
    %1218 = vst [vmem:[#allocation8 + $0x8] sm:$0xff] %v1185
    %1219 = vst [vmem:[#allocation8 + $0x10] sm:$0xff] %v1190
    %1220 = vst [vmem:[#allocation8 + $0x18] sm:$0xff] %v1195
    %1221 = vst [vmem:[#allocation8 + $0x20] sm:$0xff] %v1200
    %1222 = vst [vmem:[#allocation8 + $0x28] sm:$0xff] %v1205
    %1223 = vst [vmem:[#allocation8 + $0x30] sm:$0xff] %v1210
    %1224 = vst [vmem:[#allocation8 + $0x38] sm:$0xff] %v1215
    %v1225 = vmul.f32 %v995, 0.5
    %v1226 = vmul.f32 %v1000, 0.5
    %v1227 = vmul.f32 %v1005, 0.5
    %v1228 = vmul.f32 %v1010, 0.5
    %v1229 = vmul.f32 %v1015, 0.5
    %v1230 = vmul.f32 %v1020, 0.5
    %v1231 = vmul.f32 %v1025, 0.5
    %v1232 = vmul.f32 %v1030, 0.5
    %v1233 = vadd.f32 %v90, %v1225
    %v1234 = vadd.f32 %v91, %v1226
    %v1235 = vadd.f32 %v92, %v1227
    %v1236 = vadd.f32 %v93, %v1228
    %v1237 = vadd.f32 %v94, %v1229
    %v1238 = vadd.f32 %v95, %v1230
    %v1239 = vadd.f32 %v96, %v1231
    %v1240 = vadd.f32 %v97, %v1232
    %v1241 = vld [vmem:[%s14] sm:$0xff]
    %v1242 = vld [vmem:[%s14 + $0x8] sm:$0xff]
    %v1243 = vld [vmem:[%s14 + $0x10] sm:$0xff]
    %v1244 = vld [vmem:[%s14 + $0x18] sm:$0xff]
    %v1245 = vld [vmem:[%s14 + $0x20] sm:$0xff]
    %v1246 = vld [vmem:[%s14 + $0x28] sm:$0xff]
    %v1247 = vld [vmem:[%s14 + $0x30] sm:$0xff]
    %v1248 = vld [vmem:[%s14 + $0x38] sm:$0xff]
    %v1249 = vld [vmem:[%s15] sm:$0xff]
    %v1250 = vld [vmem:[%s15 + $0x8] sm:$0xff]
    %v1251 = vld [vmem:[%s15 + $0x10] sm:$0xff]
    %v1252 = vld [vmem:[%s15 + $0x18] sm:$0xff]
    %v1254 = vsel %vm280, %v1233, 0
    %v1257 = vsel %vm280, %v1234, 0
    %v1260 = vsel %vm280, %v1235, 0
    %v1263 = vsel %vm280, %v1236, 0
    %v1266 = vsel %vm280, %v1237, 0
    %v1269 = vsel %vm280, %v1238, 0
    %v1272 = vsel %vm280, %v1239, 0
    %v1275 = vsel %vm280, %v1240, 0
    %1277 = vmatprep.subr.mxu0 0.0
    %1278 = vmatpush1.msra.mxu0 %v1249
    %1279 = vmatprep.subr.mxu0 0.0
    %1280 = vmatpush1.msra.mxu0 %v1250
    %1281 = vmatprep.subr.mxu0 0.0
    %1282 = vmatpush1.msra.mxu0 %v1251
    %1283 = vmatprep.subr.mxu0 0.0
    %1284 = vmatpush1.msra.mxu0 %v1252
    %1285 = vmatprep.subr.mxu0 0.0
    %1286 = vmatpush1.msra.mxu0 0.0
    %1287 = vmatprep.subr.mxu0 0.0
    %1288 = vmatpush1.msra.mxu0 0.0
    %1289 = vmatprep.subr.mxu0 0.0
    %1290 = vmatpush1.msra.mxu0 0.0
    %1291 = vmatprep.subr.mxu0 0.0
    %1292 = vmatpush1.msra.mxu0 0.0
    %1293 = vmatprep.subr.mxu0 0.0
    %1294 = vmatpush1.msra.mxu0 0.0
    %1295 = vmatprep.subr.mxu0 0.0
    %1296 = vmatpush1.msra.mxu0 0.0
    %1297 = vmatprep.subr.mxu0 0.0
    %1298 = vmatpush1.msra.mxu0 0.0
    %1299 = vmatprep.subr.mxu0 0.0
    %1300 = vmatpush1.msra.mxu0 0.0
    %1301 = vmatprep.subr.mxu0 0.0
    %1302 = vmatpush1.msra.mxu0 0.0
    %1303 = vmatprep.subr.mxu0 0.0
    %1304 = vmatpush1.msra.mxu0 0.0
    %1305 = vmatprep.subr.mxu0 0.0
    %1306 = vmatpush1.msra.mxu0 0.0
    %1307 = vmatprep.subr.mxu0 0.0
    %1308 = vmatpush1.msra.mxu0 0.0
    %1309 = vmatprep.subr.mxu0 0.0
    %1310 = vmatpush1.msra.mxu0 0.0
    %1311 = vmatprep.subr.mxu0 0.0
    %1312 = vmatpush1.msra.mxu0 0.0
    %1313 = vmatprep.subr.mxu0 0.0
    %1314 = vmatpush1.msra.mxu0 0.0
    %1315 = vmatprep.subr.mxu0 0.0
    %1316 = vmatpush1.msra.mxu0 0.0
    %1317 = vmatprep.subr.mxu0 0.0
    %1318 = vmatpush1.msra.mxu0 0.0
    %1319 = vmatprep.subr.mxu0 0.0
    %1320 = vmatpush1.msra.mxu0 0.0
    %1321 = vmatprep.subr.mxu0 0.0
    %1322 = vmatpush1.msra.mxu0 0.0
    %1323 = vmatprep.subr.mxu0 0.0
    %1324 = vmatpush1.msra.mxu0 0.0
    %1325 = vmatprep.subr.mxu0 0.0
    %1326 = vmatpush1.msra.mxu0 0.0
    %1327 = vmatprep.subr.mxu0 0.0
    %1328 = vmatpush1.msra.mxu0 0.0
    %1329 = vmatprep.subr.mxu0 0.0
    %1330 = vmatpush1.msra.mxu0 0.0
    %1331 = vmatprep.subr.mxu0 0.0
    %1332 = vmatpush1.msra.mxu0 0.0
    %1333 = vmatprep.subr.mxu0 0.0
    %1334 = vmatpush1.msra.mxu0 0.0
    %1335 = vmatprep.subr.mxu0 0.0
    %1336 = vmatpush1.msra.mxu0 0.0
    %1337 = vmatprep.subr.mxu0 0.0
    %1338 = vmatpush1.msra.mxu0 0.0
    %1339 = vmatprep.subr.mxu0 0.0
    %1340 = vmatpush1.msra.mxu0 0.0
    %1341 = vmatprep.mubr.f32.mxu0 0.0
    %1342 = vmatmul.mubr.f32.gmra.mrb[0].mxu0 %v1254
    %v1343 = vpop.f32.mrb[0].mxu0
    %v1344 = vadd.f32 0.0, %v1343
    %v1345 = vpop.f32.mrb[0].mxu0
    %1346 = vmatprep.mubr.f32.mxu0 0.0
    %1347 = vmatmul.mubr.f32.gmra.mrb[0].mxu0 %v1257
    %v1348 = vpop.f32.mrb[0].mxu0
    %v1349 = vadd.f32 0.0, %v1348
    %v1350 = vpop.f32.mrb[0].mxu0
    %1351 = vmatprep.mubr.f32.mxu0 0.0
    %1352 = vmatmul.mubr.f32.gmra.mrb[0].mxu0 %v1260
    %v1353 = vpop.f32.mrb[0].mxu0
    %v1354 = vadd.f32 0.0, %v1353
    %v1355 = vpop.f32.mrb[0].mxu0
    %1356 = vmatprep.mubr.f32.mxu0 0.0
    %1357 = vmatmul.mubr.f32.gmra.mrb[0].mxu0 %v1263
    %v1358 = vpop.f32.mrb[0].mxu0
    %v1359 = vadd.f32 0.0, %v1358
    %v1360 = vpop.f32.mrb[0].mxu0
    %1361 = vmatprep.mubr.f32.mxu0 0.0
    %1362 = vmatmul.mubr.f32.gmra.mrb[0].mxu0 %v1266
    %v1363 = vpop.f32.mrb[0].mxu0
    %v1364 = vadd.f32 0.0, %v1363
    %v1365 = vpop.f32.mrb[0].mxu0
    %1366 = vmatprep.mubr.f32.mxu0 0.0
    %1367 = vmatmul.mubr.f32.gmra.mrb[0].mxu0 %v1269
    %v1368 = vpop.f32.mrb[0].mxu0
    %v1369 = vadd.f32 0.0, %v1368
    %v1370 = vpop.f32.mrb[0].mxu0
    %1371 = vmatprep.mubr.f32.mxu0 0.0
    %1372 = vmatmul.mubr.f32.gmra.mrb[0].mxu0 %v1272
    %v1373 = vpop.f32.mrb[0].mxu0
    %v1374 = vadd.f32 0.0, %v1373
    %v1375 = vpop.f32.mrb[0].mxu0
    %1376 = vmatprep.mubr.f32.mxu0 0.0
    %1377 = vmatmul.mubr.f32.gmra.mrb[0].mxu0 %v1275
    %v1378 = vpop.f32.mrb[0].mxu0
    %v1379 = vadd.f32 0.0, %v1378
    %v1380 = vpop.f32.mrb[0].mxu0
    %1381 = vdwg.mxu0
    %v1382 = vld [vmem:[%s16] sm:$0x3]
    %v1383 = vlaneseq
    %v1384 = vshrl.u32 %v1383, 7
    %v1385 = vsub.s32 0, %v1384
    %v1386 = vrot.slane %v1382, %v1385
    %v1387 = vmul.f32 %v1344, %v1386
    %v1388 = vmul.f32 %v1349, %v1386
    %v1389 = vmul.f32 %v1354, %v1386
    %v1390 = vmul.f32 %v1359, %v1386
    %v1391 = vmul.f32 %v1364, %v1386
    %v1392 = vmul.f32 %v1369, %v1386
    %v1393 = vmul.f32 %v1374, %v1386
    %v1394 = vmul.f32 %v1379, %v1386
    %v1395 = vsel %vm280, %v1387, 0.0
    %1396 = vadd.xlane.f32.xlu0 %v1395
    %v1397 = vpop.xlane.xlu0 %1396
    %v1398 = vsel %vm280, %v1388, 0.0
    %1399 = vadd.xlane.f32.xlu0 %v1398
    %v1400 = vpop.xlane.xlu0 %1399
    %v1401 = vsel %vm280, %v1389, 0.0
    %1402 = vadd.xlane.f32.xlu0 %v1401
    %v1403 = vpop.xlane.xlu0 %1402
    %v1404 = vsel %vm280, %v1390, 0.0
    %1405 = vadd.xlane.f32.xlu0 %v1404
    %v1406 = vpop.xlane.xlu0 %1405
    %v1407 = vsel %vm280, %v1391, 0.0
    %1408 = vadd.xlane.f32.xlu0 %v1407
    %v1409 = vpop.xlane.xlu0 %1408
    %v1410 = vsel %vm280, %v1392, 0.0
    %1411 = vadd.xlane.f32.xlu0 %v1410
    %v1412 = vpop.xlane.xlu0 %1411
    %v1413 = vsel %vm280, %v1393, 0.0
    %1414 = vadd.xlane.f32.xlu0 %v1413
    %v1415 = vpop.xlane.xlu0 %1414
    %v1416 = vsel %vm280, %v1394, 0.0
    %1417 = vadd.xlane.f32.xlu0 %v1416
    %v1418 = vpop.xlane.xlu0 %1417
    %v1420 = vrot.slane %v1382, 1
    %v1421 = vsel %vm280, %v1420, 0
    %v1424 = vsel %vm280, %v1344, 0
    %v1427 = vsel %vm280, %v1349, 0
    %v1430 = vsel %vm280, %v1354, 0
    %v1433 = vsel %vm280, %v1359, 0
    %v1436 = vsel %vm280, %v1364, 0
    %v1439 = vsel %vm280, %v1369, 0
    %v1442 = vsel %vm280, %v1374, 0
    %v1445 = vsel %vm280, %v1379, 0
    %1447 = vmatprep.subr.mxu0 0.0
    %1448 = vmatpush1.xpose.msra.mxu0 %v1424
    %1449 = vmatprep.subr.mxu0 0.0
    %1450 = vmatpush1.xpose.msra.mxu0 %v1427
    %1451 = vmatprep.subr.mxu0 0.0
    %1452 = vmatpush1.xpose.msra.mxu0 %v1430
    %1453 = vmatprep.subr.mxu0 0.0
    %1454 = vmatpush1.xpose.msra.mxu0 %v1433
    %1455 = vmatprep.subr.mxu0 0.0
    %1456 = vmatpush1.xpose.msra.mxu0 %v1436
    %1457 = vmatprep.subr.mxu0 0.0
    %1458 = vmatpush1.xpose.msra.mxu0 %v1439
    %1459 = vmatprep.subr.mxu0 0.0
    %1460 = vmatpush1.xpose.msra.mxu0 %v1442
    %1461 = vmatprep.subr.mxu0 0.0
    %1462 = vmatpush1.xpose.msra.mxu0 %v1445
    %1463 = vmatprep.subr.mxu0 0.0
    %1464 = vmatpush1.xpose.msra.mxu0 0.0
    %1465 = vmatprep.subr.mxu0 0.0
    %1466 = vmatpush1.xpose.msra.mxu0 0.0
    %1467 = vmatprep.subr.mxu0 0.0
    %1468 = vmatpush1.xpose.msra.mxu0 0.0
    %1469 = vmatprep.subr.mxu0 0.0
    %1470 = vmatpush1.xpose.msra.mxu0 0.0
    %1471 = vmatprep.subr.mxu0 0.0
    %1472 = vmatpush1.xpose.msra.mxu0 0.0
    %1473 = vmatprep.subr.mxu0 0.0
    %1474 = vmatpush1.xpose.msra.mxu0 0.0
    %1475 = vmatprep.subr.mxu0 0.0
    %1476 = vmatpush1.xpose.msra.mxu0 0.0
    %1477 = vmatprep.subr.mxu0 0.0
    %1478 = vmatpush1.xpose.msra.mxu0 0.0
    %1479 = vmatprep.subr.mxu0 0.0
    %1480 = vmatpush1.xpose.msra.mxu0 0.0
    %1481 = vmatprep.subr.mxu0 0.0
    %1482 = vmatpush1.xpose.msra.mxu0 0.0
    %1483 = vmatprep.subr.mxu0 0.0
    %1484 = vmatpush1.xpose.msra.mxu0 0.0
    %1485 = vmatprep.subr.mxu0 0.0
    %1486 = vmatpush1.xpose.msra.mxu0 0.0
    %1487 = vmatprep.subr.mxu0 0.0
    %1488 = vmatpush1.xpose.msra.mxu0 0.0
    %1489 = vmatprep.subr.mxu0 0.0
    %1490 = vmatpush1.xpose.msra.mxu0 0.0
    %1491 = vmatprep.subr.mxu0 0.0
    %1492 = vmatpush1.xpose.msra.mxu0 0.0
    %1493 = vmatprep.subr.mxu0 0.0
    %1494 = vmatpush1.xpose.msra.mxu0 0.0
    %1495 = vmatprep.subr.mxu0 0.0
    %1496 = vmatpush1.xpose.msra.mxu0 0.0
    %1497 = vmatprep.subr.mxu0 0.0
    %1498 = vmatpush1.xpose.msra.mxu0 0.0
    %1499 = vmatprep.subr.mxu0 0.0
    %1500 = vmatpush1.xpose.msra.mxu0 0.0
    %1501 = vmatprep.subr.mxu0 0.0
    %1502 = vmatpush1.xpose.msra.mxu0 0.0
    %1503 = vmatprep.subr.mxu0 0.0
    %1504 = vmatpush1.xpose.msra.mxu0 0.0
    %1505 = vmatprep.subr.mxu0 0.0
    %1506 = vmatpush1.xpose.msra.mxu0 0.0
    %1507 = vmatprep.subr.mxu0 0.0
    %1508 = vmatpush1.xpose.msra.mxu0 0.0
    %1509 = vmatprep.subr.mxu0 0.0
    %1510 = vmatpush1.xpose.msra.mxu0 0.0
    %1511 = vmatprep.mubr.f32.mxu0 0.0
    %1512 = vmatmul.mubr.f32.gmra.mrb[0].mxu0 %v1421
    %v1513 = vpop.f32.mrb[0].mxu0
    %v1514 = vadd.f32 0.0, %v1513
    %v1515 = vpop.f32.mrb[0].mxu0
    %1516 = vdwg.mxu0
    %v1517 = vlaneseq
    %v1518 = vshrl.u32 %v1517, 7
    %v1519 = vsub.s32 0, %v1518
    %v1520 = vrot.slane %v1514, %v1519
    %v1521 = vadd.f32 %v1397, %v1520
    %v1522 = vadd.f32 %v1400, %v1520
    %v1523 = vadd.f32 %v1403, %v1520
    %v1524 = vadd.f32 %v1406, %v1520
    %v1525 = vadd.f32 %v1409, %v1520
    %v1526 = vadd.f32 %v1412, %v1520
    %v1527 = vadd.f32 %v1415, %v1520
    %v1528 = vadd.f32 %v1418, %v1520
    %vm1529 = vcmp.gt.f32.partialorder %v1521, 0.0
    %vm1530 = vcmp.gt.f32.partialorder %v1522, 0.0
    %vm1531 = vcmp.gt.f32.partialorder %v1523, 0.0
    %vm1532 = vcmp.gt.f32.partialorder %v1524, 0.0
    %vm1533 = vcmp.gt.f32.partialorder %v1525, 0.0
    %vm1534 = vcmp.gt.f32.partialorder %v1526, 0.0
    %vm1535 = vcmp.gt.f32.partialorder %v1527, 0.0
    %vm1536 = vcmp.gt.f32.partialorder %v1528, 0.0
    %v1537 = vmul.f32 %v1521, 0.2
    %v1538 = vmul.f32 %v1522, 0.2
    %v1539 = vmul.f32 %v1523, 0.2
    %v1540 = vmul.f32 %v1524, 0.2
    %v1541 = vmul.f32 %v1525, 0.2
    %v1542 = vmul.f32 %v1526, 0.2
    %v1543 = vmul.f32 %v1527, 0.2
    %v1544 = vmul.f32 %v1528, 0.2
    %v1545 = vsel %vm1529, %v1521, %v1537
    %v1546 = vsel %vm1530, %v1522, %v1538
    %v1547 = vsel %vm1531, %v1523, %v1539
    %v1548 = vsel %vm1532, %v1524, %v1540
    %v1549 = vsel %vm1533, %v1525, %v1541
    %v1550 = vsel %vm1534, %v1526, %v1542
    %v1551 = vsel %vm1535, %v1527, %v1543
    %v1552 = vsel %vm1536, %v1528, %v1544
    %vm1553 = vcmp.ne.f32.partialorder %v1241, 0.0
    %vm1554 = vcmp.ne.f32.partialorder %v1242, 0.0
    %vm1555 = vcmp.ne.f32.partialorder %v1243, 0.0
    %vm1556 = vcmp.ne.f32.partialorder %v1244, 0.0
    %vm1557 = vcmp.ne.f32.partialorder %v1245, 0.0
    %vm1558 = vcmp.ne.f32.partialorder %v1246, 0.0
    %vm1559 = vcmp.ne.f32.partialorder %v1247, 0.0
    %vm1560 = vcmp.ne.f32.partialorder %v1248, 0.0
    %v1561 = vsel %vm1553, %v1545, -1e+30
    %v1562 = vsel %vm1554, %v1546, -1e+30
    %v1563 = vsel %vm1555, %v1547, -1e+30
    %v1564 = vsel %vm1556, %v1548, -1e+30
    %v1565 = vsel %vm1557, %v1549, -1e+30
    %v1566 = vsel %vm1558, %v1550, -1e+30
    %v1567 = vsel %vm1559, %v1551, -1e+30
    %v1568 = vsel %vm1560, %v1552, -1e+30
    %v1569 = vsel %vm100, %v1561, -inf
    %1570 = vmax.xlane.f32.xlu0 %v1569
    %v1571 = vpop.xlane.xlu0 %1570
    %v1572 = vsel %vm100, %v1562, -inf
    %1573 = vmax.xlane.f32.xlu0 %v1572
    %v1574 = vpop.xlane.xlu0 %1573
    %v1575 = vsel %vm100, %v1563, -inf
    %1576 = vmax.xlane.f32.xlu0 %v1575
    %v1577 = vpop.xlane.xlu0 %1576
    %v1578 = vsel %vm100, %v1564, -inf
    %1579 = vmax.xlane.f32.xlu0 %v1578
    %v1580 = vpop.xlane.xlu0 %1579
    %v1581 = vsel %vm100, %v1565, -inf
    %1582 = vmax.xlane.f32.xlu0 %v1581
    %v1583 = vpop.xlane.xlu0 %1582
    %v1584 = vsel %vm100, %v1566, -inf
    %1585 = vmax.xlane.f32.xlu0 %v1584
    %v1586 = vpop.xlane.xlu0 %1585
    %v1587 = vsel %vm100, %v1567, -inf
    %1588 = vmax.xlane.f32.xlu0 %v1587
    %v1589 = vpop.xlane.xlu0 %1588
    %v1590 = vsel %vm100, %v1568, -inf
    %1591 = vmax.xlane.f32.xlu0 %v1590
    %v1592 = vpop.xlane.xlu0 %1591
    %v1593 = vsub.f32 %v1545, %v1571
    %v1594 = vsub.f32 %v1546, %v1574
    %v1595 = vsub.f32 %v1547, %v1577
    %v1596 = vsub.f32 %v1548, %v1580
    %v1597 = vsub.f32 %v1549, %v1583
    %v1598 = vsub.f32 %v1550, %v1586
    %v1599 = vsub.f32 %v1551, %v1589
    %v1600 = vsub.f32 %v1552, %v1592
    %v1601 = vmul.f32 %v1593, 1.442695
    %v1602 = vpow.pop %v1601
    %v1603 = vmul.f32 %v1594, 1.442695
    %v1604 = vpow.pop %v1603
    %v1605 = vmul.f32 %v1595, 1.442695
    %v1606 = vpow.pop %v1605
    %v1607 = vmul.f32 %v1596, 1.442695
    %v1608 = vpow.pop %v1607
    %v1609 = vmul.f32 %v1597, 1.442695
    %v1610 = vpow.pop %v1609
    %v1611 = vmul.f32 %v1598, 1.442695
    %v1612 = vpow.pop %v1611
    %v1613 = vmul.f32 %v1599, 1.442695
    %v1614 = vpow.pop %v1613
    %v1615 = vmul.f32 %v1600, 1.442695
    %v1616 = vpow.pop %v1615
    %v1617 = vsel %vm1553, %v1602, 0.0
    %v1618 = vsel %vm1554, %v1604, 0.0
    %v1619 = vsel %vm1555, %v1606, 0.0
    %v1620 = vsel %vm1556, %v1608, 0.0
    %v1621 = vsel %vm1557, %v1610, 0.0
    %v1622 = vsel %vm1558, %v1612, 0.0
    %v1623 = vsel %vm1559, %v1614, 0.0
    %v1624 = vsel %vm1560, %v1616, 0.0
    %v1625 = vsel %vm100, %v1617, 0.0
    %1626 = vadd.xlane.f32.xlu0 %v1625
    %v1627 = vpop.xlane.xlu0 %1626
    %v1628 = vsel %vm100, %v1618, 0.0
    %1629 = vadd.xlane.f32.xlu0 %v1628
    %v1630 = vpop.xlane.xlu0 %1629
    %v1631 = vsel %vm100, %v1619, 0.0
    %1632 = vadd.xlane.f32.xlu0 %v1631
    %v1633 = vpop.xlane.xlu0 %1632
    %v1634 = vsel %vm100, %v1620, 0.0
    %1635 = vadd.xlane.f32.xlu0 %v1634
    %v1636 = vpop.xlane.xlu0 %1635
    %v1637 = vsel %vm100, %v1621, 0.0
    %1638 = vadd.xlane.f32.xlu0 %v1637
    %v1639 = vpop.xlane.xlu0 %1638
    %v1640 = vsel %vm100, %v1622, 0.0
    %1641 = vadd.xlane.f32.xlu0 %v1640
    %v1642 = vpop.xlane.xlu0 %1641
    %v1643 = vsel %vm100, %v1623, 0.0
    %1644 = vadd.xlane.f32.xlu0 %v1643
    %v1645 = vpop.xlane.xlu0 %1644
    %v1646 = vsel %vm100, %v1624, 0.0
    %1647 = vadd.xlane.f32.xlu0 %v1646
    %v1648 = vpop.xlane.xlu0 %1647
    %v1650 = vsel %vm100, %v1617, 0
    %v1653 = vsel %vm100, %v1618, 0
    %v1656 = vsel %vm100, %v1619, 0
    %v1659 = vsel %vm100, %v1620, 0
    %v1662 = vsel %vm100, %v1621, 0
    %v1665 = vsel %vm100, %v1622, 0
    %v1668 = vsel %vm100, %v1623, 0
    %v1671 = vsel %vm100, %v1624, 0
    %1673 = vmatprep.subr.mxu0 0.0
    %1674 = vmatpush1.msra.mxu0 %v1344
    %1675 = vmatprep.subr.mxu0 0.0
    %1676 = vmatpush1.msra.mxu0 %v1349
    %1677 = vmatprep.subr.mxu0 0.0
    %1678 = vmatpush1.msra.mxu0 %v1354
    %1679 = vmatprep.subr.mxu0 0.0
    %1680 = vmatpush1.msra.mxu0 %v1359
    %1681 = vmatprep.subr.mxu0 0.0
    %1682 = vmatpush1.msra.mxu0 %v1364
    %1683 = vmatprep.subr.mxu0 0.0
    %1684 = vmatpush1.msra.mxu0 %v1369
    %1685 = vmatprep.subr.mxu0 0.0
    %1686 = vmatpush1.msra.mxu0 %v1374
    %1687 = vmatprep.subr.mxu0 0.0
    %1688 = vmatpush1.msra.mxu0 %v1379
    %1689 = vmatprep.subr.mxu0 0.0
    %1690 = vmatpush1.msra.mxu0 0.0
    %1691 = vmatprep.subr.mxu0 0.0
    %1692 = vmatpush1.msra.mxu0 0.0
    %1693 = vmatprep.subr.mxu0 0.0
    %1694 = vmatpush1.msra.mxu0 0.0
    %1695 = vmatprep.subr.mxu0 0.0
    %1696 = vmatpush1.msra.mxu0 0.0
    %1697 = vmatprep.subr.mxu0 0.0
    %1698 = vmatpush1.msra.mxu0 0.0
    %1699 = vmatprep.subr.mxu0 0.0
    %1700 = vmatpush1.msra.mxu0 0.0
    %1701 = vmatprep.subr.mxu0 0.0
    %1702 = vmatpush1.msra.mxu0 0.0
    %1703 = vmatprep.subr.mxu0 0.0
    %1704 = vmatpush1.msra.mxu0 0.0
    %1705 = vmatprep.subr.mxu0 0.0
    %1706 = vmatpush1.msra.mxu0 0.0
    %1707 = vmatprep.subr.mxu0 0.0
    %1708 = vmatpush1.msra.mxu0 0.0
    %1709 = vmatprep.subr.mxu0 0.0
    %1710 = vmatpush1.msra.mxu0 0.0
    %1711 = vmatprep.subr.mxu0 0.0
    %1712 = vmatpush1.msra.mxu0 0.0
    %1713 = vmatprep.subr.mxu0 0.0
    %1714 = vmatpush1.msra.mxu0 0.0
    %1715 = vmatprep.subr.mxu0 0.0
    %1716 = vmatpush1.msra.mxu0 0.0
    %1717 = vmatprep.subr.mxu0 0.0
    %1718 = vmatpush1.msra.mxu0 0.0
    %1719 = vmatprep.subr.mxu0 0.0
    %1720 = vmatpush1.msra.mxu0 0.0
    %1721 = vmatprep.subr.mxu0 0.0
    %1722 = vmatpush1.msra.mxu0 0.0
    %1723 = vmatprep.subr.mxu0 0.0
    %1724 = vmatpush1.msra.mxu0 0.0
    %1725 = vmatprep.subr.mxu0 0.0
    %1726 = vmatpush1.msra.mxu0 0.0
    %1727 = vmatprep.subr.mxu0 0.0
    %1728 = vmatpush1.msra.mxu0 0.0
    %1729 = vmatprep.subr.mxu0 0.0
    %1730 = vmatpush1.msra.mxu0 0.0
    %1731 = vmatprep.subr.mxu0 0.0
    %1732 = vmatpush1.msra.mxu0 0.0
    %1733 = vmatprep.subr.mxu0 0.0
    %1734 = vmatpush1.msra.mxu0 0.0
    %1735 = vmatprep.subr.mxu0 0.0
    %1736 = vmatpush1.msra.mxu0 0.0
    %1737 = vmatprep.mubr.f32.mxu0 0.0
    %1738 = vmatmul.mubr.f32.gmra.mrb[0].mxu0 %v1650
    %v1739 = vpop.f32.mrb[0].mxu0
    %v1740 = vadd.f32 0.0, %v1739
    %v1741 = vpop.f32.mrb[0].mxu0
    %1742 = vmatprep.mubr.f32.mxu0 0.0
    %1743 = vmatmul.mubr.f32.gmra.mrb[0].mxu0 %v1653
    %v1744 = vpop.f32.mrb[0].mxu0
    %v1745 = vadd.f32 0.0, %v1744
    %v1746 = vpop.f32.mrb[0].mxu0
    %1747 = vmatprep.mubr.f32.mxu0 0.0
    %1748 = vmatmul.mubr.f32.gmra.mrb[0].mxu0 %v1656
    %v1749 = vpop.f32.mrb[0].mxu0
    %v1750 = vadd.f32 0.0, %v1749
    %v1751 = vpop.f32.mrb[0].mxu0
    %1752 = vmatprep.mubr.f32.mxu0 0.0
    %1753 = vmatmul.mubr.f32.gmra.mrb[0].mxu0 %v1659
    %v1754 = vpop.f32.mrb[0].mxu0
    %v1755 = vadd.f32 0.0, %v1754
    %v1756 = vpop.f32.mrb[0].mxu0
    %1757 = vmatprep.mubr.f32.mxu0 0.0
    %1758 = vmatmul.mubr.f32.gmra.mrb[0].mxu0 %v1662
    %v1759 = vpop.f32.mrb[0].mxu0
    %v1760 = vadd.f32 0.0, %v1759
    %v1761 = vpop.f32.mrb[0].mxu0
    %1762 = vmatprep.mubr.f32.mxu0 0.0
    %1763 = vmatmul.mubr.f32.gmra.mrb[0].mxu0 %v1665
    %v1764 = vpop.f32.mrb[0].mxu0
    %v1765 = vadd.f32 0.0, %v1764
    %v1766 = vpop.f32.mrb[0].mxu0
    %1767 = vmatprep.mubr.f32.mxu0 0.0
    %1768 = vmatmul.mubr.f32.gmra.mrb[0].mxu0 %v1668
    %v1769 = vpop.f32.mrb[0].mxu0
    %v1770 = vadd.f32 0.0, %v1769
    %v1771 = vpop.f32.mrb[0].mxu0
    %1772 = vmatprep.mubr.f32.mxu0 0.0
    %1773 = vmatmul.mubr.f32.gmra.mrb[0].mxu0 %v1671
    %v1774 = vpop.f32.mrb[0].mxu0
    %v1775 = vadd.f32 0.0, %v1774
    %v1776 = vpop.f32.mrb[0].mxu0
    %1777 = vdwg.mxu0
    %v1778 = vadd.f32 %v1627, 1e-15
    %v1779 = vadd.f32 %v1630, 1e-15
    %v1780 = vadd.f32 %v1633, 1e-15
    %v1781 = vadd.f32 %v1636, 1e-15
    %v1782 = vadd.f32 %v1639, 1e-15
    %v1783 = vadd.f32 %v1642, 1e-15
    %v1784 = vadd.f32 %v1645, 1e-15
    %v1785 = vadd.f32 %v1648, 1e-15
    %v1786 = vrcp.pop %v1778
    %v1787 = vmul.f32 %v1740, %v1786
    %v1788 = vrcp.pop %v1779
    %v1789 = vmul.f32 %v1745, %v1788
    %v1790 = vrcp.pop %v1780
    %v1791 = vmul.f32 %v1750, %v1790
    %v1792 = vrcp.pop %v1781
    %v1793 = vmul.f32 %v1755, %v1792
    %v1794 = vrcp.pop %v1782
    %v1795 = vmul.f32 %v1760, %v1794
    %v1796 = vrcp.pop %v1783
    %v1797 = vmul.f32 %v1765, %v1796
    %v1798 = vrcp.pop %v1784
    %v1799 = vmul.f32 %v1770, %v1798
    %v1800 = vrcp.pop %v1785
    %v1801 = vmul.f32 %v1775, %v1800
    %vm1802 = vcmp.gt.f32.partialorder %v1787, 0.0
    %vm1803 = vcmp.gt.f32.partialorder %v1789, 0.0
    %vm1804 = vcmp.gt.f32.partialorder %v1791, 0.0
    %vm1805 = vcmp.gt.f32.partialorder %v1793, 0.0
    %vm1806 = vcmp.gt.f32.partialorder %v1795, 0.0
    %vm1807 = vcmp.gt.f32.partialorder %v1797, 0.0
    %vm1808 = vcmp.gt.f32.partialorder %v1799, 0.0
    %vm1809 = vcmp.gt.f32.partialorder %v1801, 0.0
    %v1810 = vmul.f32 %v1787, 1.442695
    %v1811 = vpow.pop %v1810
    %v1812 = vmul.f32 %v1789, 1.442695
    %v1813 = vpow.pop %v1812
    %v1814 = vmul.f32 %v1791, 1.442695
    %v1815 = vpow.pop %v1814
    %v1816 = vmul.f32 %v1793, 1.442695
    %v1817 = vpow.pop %v1816
    %v1818 = vmul.f32 %v1795, 1.442695
    %v1819 = vpow.pop %v1818
    %v1820 = vmul.f32 %v1797, 1.442695
    %v1821 = vpow.pop %v1820
    %v1822 = vmul.f32 %v1799, 1.442695
    %v1823 = vpow.pop %v1822
    %v1824 = vmul.f32 %v1801, 1.442695
    %v1825 = vpow.pop %v1824
    %v1826 = vsub.f32 %v1811, 1.0
    %v1827 = vsub.f32 %v1813, 1.0
    %v1828 = vsub.f32 %v1815, 1.0
    %v1829 = vsub.f32 %v1817, 1.0
    %v1830 = vsub.f32 %v1819, 1.0
    %v1831 = vsub.f32 %v1821, 1.0
    %v1832 = vsub.f32 %v1823, 1.0
    %v1833 = vsub.f32 %v1825, 1.0
    %v1834 = vsel %vm1802, %v1787, %v1826
    %v1835 = vsel %vm1803, %v1789, %v1827
    %v1836 = vsel %vm1804, %v1791, %v1828
    %v1837 = vsel %vm1805, %v1793, %v1829
    %v1838 = vsel %vm1806, %v1795, %v1830
    %v1839 = vsel %vm1807, %v1797, %v1831
    %v1840 = vsel %vm1808, %v1799, %v1832
    %v1841 = vsel %vm1809, %v1801, %v1833
    %1842 = vst.msk [vmem:[%s17] sm:$0xff] %vm280, %v1834
    %1843 = vst.msk [vmem:[%s17 + $0x8] sm:$0xff] %vm280, %v1835
    %1844 = vst.msk [vmem:[%s17 + $0x10] sm:$0xff] %vm280, %v1836
    %1845 = vst.msk [vmem:[%s17 + $0x18] sm:$0xff] %vm280, %v1837
    %1846 = vst.msk [vmem:[%s17 + $0x20] sm:$0xff] %vm280, %v1838
    %1847 = vst.msk [vmem:[%s17 + $0x28] sm:$0xff] %vm280, %v1839
    %1848 = vst.msk [vmem:[%s17 + $0x30] sm:$0xff] %vm280, %v1840
    %1849 = vst.msk [vmem:[%s17 + $0x38] sm:$0xff] %vm280, %v1841
    // Predicated region
    $region74: #{tpu_custom_call.1} parent=1 // pred_check
      _
    $region75: #{tpu_custom_call.1} parent=1 // pred_check_branch
      %1851 = sbr.rel (0) target = $region77
    $region76: #{tpu_custom_call.1} parent=1 // pred_region
      _
    $region77: #{tpu_custom_call.1} parent=1 // pred_fallthru
      _
    // Predicated region
    $region78: #{tpu_custom_call.1} parent=1 // pred_check
      _
    $region79: #{tpu_custom_call.1} parent=1 // pred_check_branch
      %1853 = sbr.rel (0) target = $region81
    $region80: #{tpu_custom_call.1} parent=1 // pred_region
      %s1855 = ssub.s32 256, 256
      %1856 = vsyncadd [#allocation6], %s1855
      %s1857 = sshll.u32 [#allocation7], 4
      %s1858 = int_to_ptr.vmem [resolvable:$true] %s1857
      %1863 = dma.vmem_to_hbm [thread:$0]  %s1858, 256, %s18, [#allocation6], 128, 128, 8
    $region81: #{tpu_custom_call.1} parent=1 // pred_fallthru
      _
    // Predicated region
    $region82: #{tpu_custom_call.1} parent=1 // pred_check
      _
    $region83: #{tpu_custom_call.1} parent=1 // pred_check_branch
      %1865 = sbr.rel (0) target = $region85
    $region84: #{tpu_custom_call.1} parent=1 // pred_region
      %s1867 = ssub.s32 1024, 1024
      %1868 = vsyncadd [#allocation9], %s1867
      %s1869 = sshll.u32 [#allocation8], 4
      %s1870 = int_to_ptr.vmem [resolvable:$true] %s1869
      %1875 = dma.vmem_to_hbm [thread:$0]  %s1870, 1024, %s19, [#allocation9], 128, 128, 8
    $region85: #{tpu_custom_call.1} parent=1 // pred_fallthru
      _
    // Predicated region
    $region86: #{tpu_custom_call.1} parent=1 // pred_check
      _
    $region87: #{tpu_custom_call.1} parent=1 // pred_check_branch
      %1877 = sbr.rel (0) target = $region89
    $region88: #{tpu_custom_call.1} parent=1 // pred_region
      _
    $region89: #{tpu_custom_call.1} parent=1 // pred_fallthru
      _
    // Predicated region
    $region90: #{tpu_custom_call.1} parent=1 // pred_check
      _
    $region91: #{tpu_custom_call.1} parent=1 // pred_check_branch
      %1879 = sbr.rel (0) target = $region93
    $region92: #{tpu_custom_call.1} parent=1 // pred_region
      %1880 = dma.done [#allocation6], 256
    $region93: #{tpu_custom_call.1} parent=1 // pred_fallthru
      _
    // Predicated region
    $region94: #{tpu_custom_call.1} parent=1 // pred_check
      _
    $region95: #{tpu_custom_call.1} parent=1 // pred_check_branch
      %1882 = sbr.rel (0) target = $region97
    $region96: #{tpu_custom_call.1} parent=1 // pred_region
      %1883 = dma.done [#allocation9], 1024
    $region97: #{tpu_custom_call.1} parent=1 // pred_fallthru
      _
    %1884 = vsyncpa [#allocation5], 1
    %1885 = vsyncpa [#allocation6], 1
    %1886 = vsyncpa [#allocation9], 1

</llo_original>
